<compile_context>
chip_gen: v6e
topology: v6e:2x2x1
jax: 0.10.0
libtpu: 0.0.40
codegen_flags: <defaults>
</compile_context>

<pallas_src>
import functools
import math

import jax
import jax.numpy as jnp
from jax.experimental import pallas as pl
from jax.experimental.pallas import tpu as pltpu


_DTYPES = {"float32": jnp.float32, "bfloat16": jnp.bfloat16}


def _round_up(n, m):
  return ((n + m - 1) // m) * m


# ----------------------------- Pallas kernel -------------------------------

def _fused_cross_connector_kernel(
    x_ref, w1_ref, b1_ref, w2_ref, b2_ref, w3_ref, b3_ref,
    w4_ref, b4_ref, w5_ref, b5_ref, w6_ref, b6_ref, o_ref,
    *, ntiles, block_rows, interm_pad, compute_dtype):
  """One batch block: tile-folded per-tile MLP + global MLP."""

  def mm(a, b):
    # MXU matmul in `compute_dtype` (bf16 on v6e/v7x), f32 accumulation.
    return jnp.dot(a.astype(compute_dtype), b,
                   preferred_element_type=jnp.float32)

  # x block is already tile-major folded: row = t*block_rows + r.
  xm = x_ref[...]                                   # (ntiles*block_rows, ts)

  # Per-tile MLP as three big matmuls (M folded over tiles); bias broadcasts
  # happen once per layer, not once per tile.  Bias/sigmoid stay f32.
  h = jax.nn.sigmoid(mm(xm, w1_ref[...]) + b1_ref[...])
  h = jax.nn.sigmoid(mm(h, w2_ref[...]) + b2_ref[...])
  h = jax.nn.sigmoid(mm(h, w3_ref[...]) + b3_ref[...])   # (rows, interm_pad)

  # Flatten(-2,-1) + first global Linear as a K-accumulation over tiles.
  # h is sliced along rows (sublanes, cheap); w4 is sliced as a static Ref view.
  # TODO(synk): if ntiles grows large, move acc to a VMEM scratch and use
  # lax.fori_loop to bound vreg live ranges.
  acc = None
  for t in range(ntiles):                       # ntiles is small & static
    ht = h[t * block_rows:(t + 1) * block_rows, :]
    part = mm(ht, w4_ref[t * interm_pad:(t + 1) * interm_pad, :])
    acc = part if acc is None else acc + part

  g = jax.nn.sigmoid(acc + b4_ref[...])
  g = jax.nn.sigmoid(mm(g, w5_ref[...]) + b5_ref[...])
  out = mm(g, w6_ref[...]) + b6_ref[...]        # final Linear, no activation
  o_ref[...] = out.astype(o_ref.dtype)


# ------------------------------ Parameter init -----------------------------

def _init_linear(key, fan_in, fan_out):
  """Mimics torch.nn.Linear default init: uniform(+/- 1/sqrt(fan_in))."""
  kw, kb = jax.random.split(key)
  bound = 1.0 / jnp.sqrt(jnp.float32(fan_in))
  w = jax.random.uniform(kw, (fan_in, fan_out), jnp.float32, -bound, bound)
  b = jax.random.uniform(kb, (1, fan_out), jnp.float32, -bound, bound)
  return w, b


def init_cross_connector_params(key, tile_size, ntiles, interm, output):
  h1 = (tile_size + interm) // 2
  h2 = (ntiles * interm + output) // 2
  dims = [
      (tile_size, tile_size),
      (tile_size, h1),
      (h1, interm),
      (ntiles * interm, ntiles * interm),
      (ntiles * interm, h2),
      (h2, output),
  ]
  keys = jax.random.split(key, len(dims))
  params = []
  for k, (fi, fo) in zip(keys, dims):
    params.extend(_init_linear(k, fi, fo))
  return tuple(params)  # (w1,b1,w2,b2,w3,b3,w4,b4,w5,b5,w6,b6)


# ------------------------------ Forward impl --------------------------------

def _forward_impl(x, params, *, tile_dim, compute_dtype_name, block_rows,
                  vmem_limit, weight_buffered):
  (w1, b1, w2, b2, w3, b3, w4, b4, w5, b5, w6, b6) = params
  compute_dtype = _DTYPES[compute_dtype_name]

  # nn.Flatten(-tile_dim, -1): flatten trailing dims into tile_size.
  lead = x.shape[:-tile_dim]                  # (..., ntiles)
  tile_size = math.prod(x.shape[-tile_dim:])
  ntiles = lead[-1]
  batch_shape = lead[:-1]
  B = math.prod(batch_shape) if batch_shape else 1

  interm = w3.shape[1]
  h1 = w2.shape[1]
  gin = ntiles * interm
  h2 = w5.shape[1]
  output = w6.shape[1]

  # Lane padding (multiples of 128) for every intermediate feature dim.
  d1p = _round_up(tile_size, 128)   # layer-1 output
  d2p = _round_up(h1, 128)
  d3p = _round_up(interm, 128)
  ginp = _round_up(gin, 128)
  d5p = _round_up(h2, 128)
  d6p = _round_up(output, 128)

  def pad2(w, rows, cols):
    return jnp.pad(w, ((0, rows - w.shape[0]), (0, cols - w.shape[1])))

  # Zero-padded weight rows make the lane padding mathematically exact (the
  # sigmoid(0)=0.5 values in padded activation columns hit zero weight rows).
  w1p = pad2(w1, tile_size, d1p); b1p = pad2(b1, 1, d1p)
  w2p = pad2(w2, d1p, d2p);       b2p = pad2(b2, 1, d2p)
  w3p = pad2(w3, d2p, d3p);       b3p = pad2(b3, 1, d3p)
  # w4 rows are tile-major (t*interm + j): re-block per tile so padded interm
  # rows line up with the padded per-tile activations.
  w4p = jnp.pad(w4.reshape(ntiles, interm, gin),
                ((0, 0), (0, d3p - interm), (0, ginp - gin))
                ).reshape(ntiles * d3p, ginp)
  b4p = pad2(b4, 1, ginp)
  w5p = pad2(w5, ginp, d5p);      b5p = pad2(b5, 1, d5p)
  w6p = pad2(w6, d5p, d6p);       b6p = pad2(b6, 1, d6p)

  # Batch padding + tile-major fold per batch block (done once in HBM by XLA
  # so the kernel never reshapes/relayouts the activation block).
  B_pad = _round_up(B, block_rows)
  nblocks = B_pad // block_rows
  x3 = x.reshape(B, ntiles, tile_size)
  if B_pad != B:
    x3 = jnp.pad(x3, ((0, B_pad - B), (0, 0), (0, 0)))
  xf = (x3.reshape(nblocks, block_rows, ntiles, tile_size)
          .transpose(0, 2, 1, 3)           # (nblk, ntiles, block_rows, ts)
          .reshape(nblocks * ntiles * block_rows, tile_size)
          .astype(compute_dtype))

  # MXU operands in compute dtype; biases / accum / sigmoid stay f32.
  w1c, w2c, w3c, w4c, w5c, w6c = (
      w.astype(compute_dtype) for w in (w1p, w2p, w3p, w4p, w5p, w6p))
  weight_args = (w1c, b1p, w2c, b2p, w3c, b3p, w4c, b4p, w5c, b5p, w6c, b6p)

  grid = (nblocks,)
  const_map = lambda i: (0, 0)    # weights DMA'd once, stay resident in VMEM
  if weight_buffered:
    # Single buffer for constants: they never change across grid steps, so the
    # default double buffer would just waste VMEM.
    wspec = lambda w: pl.BlockSpec(w.shape, const_map,
                                   pipeline_mode=pl.Buffered(1))
  else:
    wspec = lambda w: pl.BlockSpec(w.shape, const_map)

  in_specs = [pl.BlockSpec((ntiles * block_rows, tile_size), lambda i: (i, 0))]
  in_specs += [wspec(w) for w in weight_args]
  out_specs = pl.BlockSpec((block_rows, d6p), lambda i: (i, 0))

  rows = ntiles * block_rows
  flops_step = 2 * (rows * (tile_size * d1p + d1p * d2p + d2p * d3p)
                    + block_rows * (ntiles * d3p * ginp + ginp * d5p
                                    + d5p * d6p))
  trans_step = rows * (d1p + d2p + d3p) + block_rows * (ginp + d5p)
  wgt_bytes = sum(int(w.size) * w.dtype.itemsize for w in weight_args)
  cost = pl.CostEstimate(
      flops=int(nblocks * flops_step),
      transcendentals=int(nblocks * trans_step),
      bytes_accessed=int(int(xf.size) * xf.dtype.itemsize + wgt_bytes
                         + B_pad * d6p * 4),
  )

  kernel = functools.partial(
      _fused_cross_connector_kernel,
      ntiles=ntiles, block_rows=block_rows, interm_pad=d3p,
      compute_dtype=compute_dtype)

  # Output stays f32 (tiny: d6p lanes); downstream can cast if desired.
  out = pl.pallas_call(
      kernel,
      out_shape=jax.ShapeDtypeStruct((B_pad, d6p), jnp.float32),
      grid=grid,
      in_specs=in_specs,
      out_specs=out_specs,
      compiler_params=pltpu.CompilerParams(
          dimension_semantics=("parallel",),
          vmem_limit_bytes=vmem_limit),
      cost_estimate=cost,
  )(xf, *weight_args)

  return out[:B, :output].reshape(batch_shape + (output,))


_forward_jit = jax.jit(
    _forward_impl,
    static_argnames=("tile_dim", "compute_dtype_name", "block_rows",
                     "vmem_limit", "weight_buffered"))


# ------------------------------ Public wrapper -------------------------------

def _tpu_vmem_capacity_bytes():
  try:
    return int(pltpu.get_tpu_info().vmem_capacity_bytes)
  except Exception:
    return 64 << 20   # conservative (v7x-sized) fallback


def cross_connector_forward(x, params, tile_dim=3,
                            compute_dtype_name="bfloat16"):
  (w1, b1, w2, b2, w3, b3, w4, b4, w5, b5, w6, b6) = params
  compute_dtype = _DTYPES[compute_dtype_name]

  lead = x.shape[:-tile_dim]
  tile_size = math.prod(x.shape[-tile_dim:])
  ntiles = lead[-1]
  batch_shape = lead[:-1]
  B = math.prod(batch_shape) if batch_shape else 1

  interm = w3.shape[1]; h1 = w2.shape[1]; gin = ntiles * interm
  h2 = w5.shape[1]; output = w6.shape[1]
  d1p = _round_up(tile_size, 128); d2p = _round_up(h1, 128)
  d3p = _round_up(interm, 128); ginp = _round_up(gin, 128)
  d5p = _round_up(h2, 128); d6p = _round_up(output, 128)

  # Generation-aware row tiling: bigger tiles on 128 MiB chips (v5e/v6e),
  # smaller on 64 MiB v7x; keep the parallel batch axis splittable across the
  # 2 TensorCores assumed for v7x-class chips.
  vmem_cap = _tpu_vmem_capacity_bytes()
  max_block_rows = 512 if vmem_cap >= (96 << 20) else 256
  assumed_cores = 2 if vmem_cap <= (64 << 20) else 1
  block_rows = min(max_block_rows,
                   max(8, _round_up(pl.cdiv(B, assumed_cores), 8)))

  wdt = jnp.dtype(compute_dtype).itemsize
  wgt_bytes = wdt * (tile_size * d1p + d1p * d2p + d2p * d3p
                     + ntiles * d3p * ginp + ginp * d5p + d5p * d6p)
  wgt_bytes += 4 * (d1p + d2p + d3p + ginp + d5p + d6p)   # f32 biases
  vmem_budget = int(vmem_cap * 0.8)   # leave headroom for compiler scratch

  def needed(br):
    act = ntiles * br * tile_size * wdt      # x block (compute dtype)
    outb = br * d6p * 4                      # f32 output block
    return 2 * (act + outb) + wgt_bytes + (4 << 20)   # weights single-buffered

  while block_rows > 8 and needed(block_rows) > vmem_budget:
    block_rows = max(8, _round_up(block_rows // 2, 8))
  # TODO(synk): if resident weights alone (w4 ~ (ntiles*interm)^2) exceed the
  # VMEM budget, add a second 'arbitrary' grid axis tiling w4's N dimension
  # with a scratch accumulator instead of keeping all weights resident.
  vmem_limit = int(min(vmem_budget, max(needed(block_rows), 8 << 20)))

  kw = dict(tile_dim=tile_dim, compute_dtype_name=compute_dtype_name,
            block_rows=block_rows, vmem_limit=vmem_limit)
  try:
    out = _forward_jit(x, params, weight_buffered=True, **kw)
    jax.block_until_ready(out)
    return out
  except Exception:
    # Fallback for JAX versions without BlockSpec(pipeline_mode=...)/Buffered.
    return _forward_jit(x, params, weight_buffered=False, **kw)


# ------------------------------ Reference ------------------------------------

def _reference_forward(x, params, tile_dim=3):
  (w1, b1, w2, b2, w3, b3, w4, b4, w5, b5, w6, b6) = params
  with jax.default_matmul_precision("highest"):
    lead = x.shape[:-tile_dim]
    ts = math.prod(x.shape[-tile_dim:])
    h = x.reshape(lead + (ts,))
    h = jax.nn.sigmoid(h @ w1 + b1)
    h = jax.nn.sigmoid(h @ w2 + b2)
    h = jax.nn.sigmoid(h @ w3 + b3)
    h = h.reshape(lead[:-1] + (lead[-1] * h.shape[-1],))
    h = jax.nn.sigmoid(h @ w4 + b4)
    h = jax.nn.sigmoid(h @ w5 + b5)
    return h @ w6 + b6


# ----------------------------------- main -------------------------------------

if __name__ == "__main__":
  # Small shapes consistent with the module: tile = (C, H, W) = (4, 4, 4).
  B, NTILES, C, H, W = 2, 4, 4, 4, 4
  TILE_SIZE = C * H * W          # 64
  INTERM = 32
  OUTPUT = 16

  key = jax.random.PRNGKey(0)
  kx, kp = jax.random.split(key)

  x = jax.random.normal(kx, (B, NTILES, C, H, W), jnp.float32)
  params = init_cross_connector_params(kp, TILE_SIZE, NTILES, INTERM, OUTPUT)

  ref = _reference_forward(x, params)

  # f32 matmul path: tight-ish check against the pure-JAX reference.
  out_f32 = jax.block_until_ready(
      cross_connector_forward(x, params, compute_dtype_name="float32"))
  assert out_f32.shape == (B, OUTPUT), out_f32.shape
  assert jnp.allclose(out_f32, ref, atol=1e-2, rtol=1e-2), "f32 mismatch"

  # bf16 MXU path (default; per-chip peak on v6e/v7x): looser tolerance
  # (the input x itself is quantized to bf16 on this path -- intentional).
  out_bf16 = jax.block_until_ready(cross_connector_forward(x, params))
  assert out_bf16.shape == (B, OUTPUT), out_bf16.shape
  assert jnp.allclose(out_bf16, ref, atol=6e-2, rtol=6e-2), "bf16 mismatch"

  print("KERNEL_OK")
</pallas_src>

<mosaic_0001>
module attributes {stable_mosaic.version = 11 : i64} {
  func.func @_fused_cross_connector_kernel(%arg0: i32, %arg1: memref<32x64xf32, #tpu.memory_space<vmem>>, %arg2: memref<64x128xf32, #tpu.memory_space<vmem>>, %arg3: memref<1x128xf32, #tpu.memory_space<vmem>>, %arg4: memref<128x128xf32, #tpu.memory_space<vmem>>, %arg5: memref<1x128xf32, #tpu.memory_space<vmem>>, %arg6: memref<128x128xf32, #tpu.memory_space<vmem>>, %arg7: memref<1x128xf32, #tpu.memory_space<vmem>>, %arg8: memref<512x128xf32, #tpu.memory_space<vmem>>, %arg9: memref<1x128xf32, #tpu.memory_space<vmem>>, %arg10: memref<128x128xf32, #tpu.memory_space<vmem>>, %arg11: memref<1x128xf32, #tpu.memory_space<vmem>>, %arg12: memref<128x128xf32, #tpu.memory_space<vmem>>, %arg13: memref<1x128xf32, #tpu.memory_space<vmem>>, %arg14: memref<8x128xf32, #tpu.memory_space<vmem>>) attributes {dimension_semantics = [#tpu.dimension_semantics<parallel>], iteration_bounds = array<i64: 1>, scalar_prefetch = 0 : i64, scratch_operands = 0 : i64, tpu.core_type = #tpu.core_type<tc>, window_params = [{transform_indices = @transform_0, window_bounds = array<i64: 32, 64>}, {pipeline_mode = #tpu.pipeline_mode<synchronous>, transform_indices = @transform_1, window_bounds = array<i64: 64, 128>}, {pipeline_mode = #tpu.pipeline_mode<synchronous>, transform_indices = @transform_2, window_bounds = array<i64: 1, 128>}, {pipeline_mode = #tpu.pipeline_mode<synchronous>, transform_indices = @transform_3, window_bounds = array<i64: 128, 128>}, {pipeline_mode = #tpu.pipeline_mode<synchronous>, transform_indices = @transform_4, window_bounds = array<i64: 1, 128>}, {pipeline_mode = #tpu.pipeline_mode<synchronous>, transform_indices = @transform_5, window_bounds = array<i64: 128, 128>}, {pipeline_mode = #tpu.pipeline_mode<synchronous>, transform_indices = @transform_6, window_bounds = array<i64: 1, 128>}, {pipeline_mode = #tpu.pipeline_mode<synchronous>, transform_indices = @transform_7, window_bounds = array<i64: 512, 128>}, {pipeline_mode = #tpu.pipeline_mode<synchronous>, transform_indices = @transform_8, window_bounds = array<i64: 1, 128>}, {pipeline_mode = #tpu.pipeline_mode<synchronous>, transform_indices = @transform_9, window_bounds = array<i64: 128, 128>}, {pipeline_mode = #tpu.pipeline_mode<synchronous>, transform_indices = @transform_10, window_bounds = array<i64: 1, 128>}, {pipeline_mode = #tpu.pipeline_mode<synchronous>, transform_indices = @transform_11, window_bounds = array<i64: 128, 128>}, {pipeline_mode = #tpu.pipeline_mode<synchronous>, transform_indices = @transform_12, window_bounds = array<i64: 1, 128>}, {transform_indices = @transform_13, window_bounds = array<i64: 8, 128>}]} {
    %c0 = arith.constant 0 : index
    %c0_0 = arith.constant 0 : index
    %0 = vector.load %arg1[%c0, %c0_0] : memref<32x64xf32, #tpu.memory_space<vmem>>, vector<32x64xf32>
    %c0_1 = arith.constant 0 : index
    %c0_2 = arith.constant 0 : index
    %1 = vector.load %arg2[%c0_1, %c0_2] : memref<64x128xf32, #tpu.memory_space<vmem>>, vector<64x128xf32>
    %cst = arith.constant dense<0.000000e+00> : vector<32x128xf32>
    %2 = tpu.matmul %0, %1, %cst {dimension_numbers = #tpu.dot_dimension_numbers<[1], [0], [0], [1], [0, 0, 1, 1], [], []>} : vector<32x64xf32>, vector<64x128xf32>, vector<32x128xf32> -> vector<32x128xf32>
    %c0_3 = arith.constant 0 : index
    %c0_4 = arith.constant 0 : index
    %3 = vector.load %arg3[%c0_3, %c0_4] : memref<1x128xf32, #tpu.memory_space<vmem>>, vector<1x128xf32>
    %4 = vector.broadcast %3 : vector<1x128xf32> to vector<32x128xf32>
    %5 = arith.addf %2, %4 : vector<32x128xf32>
    %6 = arith.negf %5 : vector<32x128xf32>
    %7 = math.exp %6 : vector<32x128xf32>
    %cst_5 = arith.constant 1.000000e+00 : f32
    %8 = vector.broadcast %cst_5 : f32 to vector<32x128xf32>
    %9 = arith.addf %8, %7 : vector<32x128xf32>
    %10 = arith.divf %8, %9 : vector<32x128xf32>
    %c0_6 = arith.constant 0 : index
    %c0_7 = arith.constant 0 : index
    %11 = vector.load %arg4[%c0_6, %c0_7] : memref<128x128xf32, #tpu.memory_space<vmem>>, vector<128x128xf32>
    %cst_8 = arith.constant dense<0.000000e+00> : vector<32x128xf32>
    %12 = tpu.matmul %10, %11, %cst_8 {dimension_numbers = #tpu.dot_dimension_numbers<[1], [0], [0], [1], [0, 0, 1, 1], [], []>} : vector<32x128xf32>, vector<128x128xf32>, vector<32x128xf32> -> vector<32x128xf32>
    %c0_9 = arith.constant 0 : index
    %c0_10 = arith.constant 0 : index
    %13 = vector.load %arg5[%c0_9, %c0_10] : memref<1x128xf32, #tpu.memory_space<vmem>>, vector<1x128xf32>
    %14 = vector.broadcast %13 : vector<1x128xf32> to vector<32x128xf32>
    %15 = arith.addf %12, %14 : vector<32x128xf32>
    %16 = arith.negf %15 : vector<32x128xf32>
    %17 = math.exp %16 : vector<32x128xf32>
    %cst_11 = arith.constant 1.000000e+00 : f32
    %18 = vector.broadcast %cst_11 : f32 to vector<32x128xf32>
    %19 = arith.addf %18, %17 : vector<32x128xf32>
    %20 = arith.divf %18, %19 : vector<32x128xf32>
    %c0_12 = arith.constant 0 : index
    %c0_13 = arith.constant 0 : index
    %21 = vector.load %arg6[%c0_12, %c0_13] : memref<128x128xf32, #tpu.memory_space<vmem>>, vector<128x128xf32>
    %cst_14 = arith.constant dense<0.000000e+00> : vector<32x128xf32>
    %22 = tpu.matmul %20, %21, %cst_14 {dimension_numbers = #tpu.dot_dimension_numbers<[1], [0], [0], [1], [0, 0, 1, 1], [], []>} : vector<32x128xf32>, vector<128x128xf32>, vector<32x128xf32> -> vector<32x128xf32>
    %c0_15 = arith.constant 0 : index
    %c0_16 = arith.constant 0 : index
    %23 = vector.load %arg7[%c0_15, %c0_16] : memref<1x128xf32, #tpu.memory_space<vmem>>, vector<1x128xf32>
    %24 = vector.broadcast %23 : vector<1x128xf32> to vector<32x128xf32>
    %25 = arith.addf %22, %24 : vector<32x128xf32>
    %26 = arith.negf %25 : vector<32x128xf32>
    %27 = math.exp %26 : vector<32x128xf32>
    %cst_17 = arith.constant 1.000000e+00 : f32
    %28 = vector.broadcast %cst_17 : f32 to vector<32x128xf32>
    %29 = arith.addf %28, %27 : vector<32x128xf32>
    %30 = arith.divf %28, %29 : vector<32x128xf32>
    %31 = vector.extract_strided_slice %30 {offsets = [0, 0], sizes = [8, 128], strides = [1, 1]} : vector<32x128xf32> to vector<8x128xf32>
    %c0_18 = arith.constant 0 : index
    %c0_19 = arith.constant 0 : index
    %32 = vector.load %arg8[%c0_18, %c0_19] : memref<512x128xf32, #tpu.memory_space<vmem>>, vector<128x128xf32>
    %cst_20 = arith.constant dense<0.000000e+00> : vector<8x128xf32>
    %33 = tpu.matmul %31, %32, %cst_20 {dimension_numbers = #tpu.dot_dimension_numbers<[1], [0], [0], [1], [0, 0, 1, 1], [], []>} : vector<8x128xf32>, vector<128x128xf32>, vector<8x128xf32> -> vector<8x128xf32>
    %34 = vector.extract_strided_slice %30 {offsets = [8, 0], sizes = [8, 128], strides = [1, 1]} : vector<32x128xf32> to vector<8x128xf32>
    %c128 = arith.constant 128 : index
    %c0_21 = arith.constant 0 : index
    %35 = vector.load %arg8[%c128, %c0_21] : memref<512x128xf32, #tpu.memory_space<vmem>>, vector<128x128xf32>
    %cst_22 = arith.constant dense<0.000000e+00> : vector<8x128xf32>
    %36 = tpu.matmul %34, %35, %cst_22 {dimension_numbers = #tpu.dot_dimension_numbers<[1], [0], [0], [1], [0, 0, 1, 1], [], []>} : vector<8x128xf32>, vector<128x128xf32>, vector<8x128xf32> -> vector<8x128xf32>
    %37 = arith.addf %33, %36 : vector<8x128xf32>
    %38 = vector.extract_strided_slice %30 {offsets = [16, 0], sizes = [8, 128], strides = [1, 1]} : vector<32x128xf32> to vector<8x128xf32>
    %c256 = arith.constant 256 : index
    %c0_23 = arith.constant 0 : index
    %39 = vector.load %arg8[%c256, %c0_23] : memref<512x128xf32, #tpu.memory_space<vmem>>, vector<128x128xf32>
    %cst_24 = arith.constant dense<0.000000e+00> : vector<8x128xf32>
    %40 = tpu.matmul %38, %39, %cst_24 {dimension_numbers = #tpu.dot_dimension_numbers<[1], [0], [0], [1], [0, 0, 1, 1], [], []>} : vector<8x128xf32>, vector<128x128xf32>, vector<8x128xf32> -> vector<8x128xf32>
    %41 = arith.addf %37, %40 : vector<8x128xf32>
    %42 = vector.extract_strided_slice %30 {offsets = [24, 0], sizes = [8, 128], strides = [1, 1]} : vector<32x128xf32> to vector<8x128xf32>
    %c384 = arith.constant 384 : index
    %c0_25 = arith.constant 0 : index
    %43 = vector.load %arg8[%c384, %c0_25] : memref<512x128xf32, #tpu.memory_space<vmem>>, vector<128x128xf32>
    %cst_26 = arith.constant dense<0.000000e+00> : vector<8x128xf32>
    %44 = tpu.matmul %42, %43, %cst_26 {dimension_numbers = #tpu.dot_dimension_numbers<[1], [0], [0], [1], [0, 0, 1, 1], [], []>} : vector<8x128xf32>, vector<128x128xf32>, vector<8x128xf32> -> vector<8x128xf32>
    %45 = arith.addf %41, %44 : vector<8x128xf32>
    %c0_27 = arith.constant 0 : index
    %c0_28 = arith.constant 0 : index
    %46 = vector.load %arg9[%c0_27, %c0_28] : memref<1x128xf32, #tpu.memory_space<vmem>>, vector<1x128xf32>
    %47 = vector.broadcast %46 : vector<1x128xf32> to vector<8x128xf32>
    %48 = arith.addf %45, %47 : vector<8x128xf32>
    %49 = arith.negf %48 : vector<8x128xf32>
    %50 = math.exp %49 : vector<8x128xf32>
    %cst_29 = arith.constant 1.000000e+00 : f32
    %51 = vector.broadcast %cst_29 : f32 to vector<8x128xf32>
    %52 = arith.addf %51, %50 : vector<8x128xf32>
    %53 = arith.divf %51, %52 : vector<8x128xf32>
    %c0_30 = arith.constant 0 : index
    %c0_31 = arith.constant 0 : index
    %54 = vector.load %arg10[%c0_30, %c0_31] : memref<128x128xf32, #tpu.memory_space<vmem>>, vector<128x128xf32>
    %cst_32 = arith.constant dense<0.000000e+00> : vector<8x128xf32>
    %55 = tpu.matmul %53, %54, %cst_32 {dimension_numbers = #tpu.dot_dimension_numbers<[1], [0], [0], [1], [0, 0, 1, 1], [], []>} : vector<8x128xf32>, vector<128x128xf32>, vector<8x128xf32> -> vector<8x128xf32>
    %c0_33 = arith.constant 0 : index
    %c0_34 = arith.constant 0 : index
    %56 = vector.load %arg11[%c0_33, %c0_34] : memref<1x128xf32, #tpu.memory_space<vmem>>, vector<1x128xf32>
    %57 = vector.broadcast %56 : vector<1x128xf32> to vector<8x128xf32>
    %58 = arith.addf %55, %57 : vector<8x128xf32>
    %59 = arith.negf %58 : vector<8x128xf32>
    %60 = math.exp %59 : vector<8x128xf32>
    %cst_35 = arith.constant 1.000000e+00 : f32
    %61 = vector.broadcast %cst_35 : f32 to vector<8x128xf32>
    %62 = arith.addf %61, %60 : vector<8x128xf32>
    %63 = arith.divf %61, %62 : vector<8x128xf32>
    %c0_36 = arith.constant 0 : index
    %c0_37 = arith.constant 0 : index
    %64 = vector.load %arg12[%c0_36, %c0_37] : memref<128x128xf32, #tpu.memory_space<vmem>>, vector<128x128xf32>
    %cst_38 = arith.constant dense<0.000000e+00> : vector<8x128xf32>
    %65 = tpu.matmul %63, %64, %cst_38 {dimension_numbers = #tpu.dot_dimension_numbers<[1], [0], [0], [1], [0, 0, 1, 1], [], []>} : vector<8x128xf32>, vector<128x128xf32>, vector<8x128xf32> -> vector<8x128xf32>
    %c0_39 = arith.constant 0 : index
    %c0_40 = arith.constant 0 : index
    %66 = vector.load %arg13[%c0_39, %c0_40] : memref<1x128xf32, #tpu.memory_space<vmem>>, vector<1x128xf32>
    %67 = vector.broadcast %66 : vector<1x128xf32> to vector<8x128xf32>
    %68 = arith.addf %65, %67 : vector<8x128xf32>
    %c0_41 = arith.constant 0 : index
    %c0_42 = arith.constant 0 : index
    %69 = vector.load %arg14[%c0_41, %c0_42] : memref<8x128xf32, #tpu.memory_space<vmem>>, vector<8x128xf32>
    tpu.vector_store %arg14[%c0_41, %c0_42], %68 {strides = array<i32>} : memref<8x128xf32, #tpu.memory_space<vmem>>, vector<8x128xf32>,
    return
  }
  func.func @transform_0(%arg0: i32) -> (i32, i32) {
    %c0_i32 = arith.constant 0 : i32
    %c0_i32_0 = arith.constant 0 : i32
    return %arg0, %c0_i32 : i32, i32
  }
  func.func @transform_1(%arg0: i32) -> (i32, i32) {
    %c0_i32 = arith.constant 0 : i32
    %c0_i32_0 = arith.constant 0 : i32
    %c0_i32_1 = arith.constant 0 : i32
    return %c0_i32, %c0_i32_0 : i32, i32
  }
  func.func @transform_2(%arg0: i32) -> (i32, i32) {
    %c0_i32 = arith.constant 0 : i32
    %c0_i32_0 = arith.constant 0 : i32
    %c0_i32_1 = arith.constant 0 : i32
    return %c0_i32, %c0_i32_0 : i32, i32
  }
  func.func @transform_3(%arg0: i32) -> (i32, i32) {
    %c0_i32 = arith.constant 0 : i32
    %c0_i32_0 = arith.constant 0 : i32
    %c0_i32_1 = arith.constant 0 : i32
    return %c0_i32, %c0_i32_0 : i32, i32
  }
  func.func @transform_4(%arg0: i32) -> (i32, i32) {
    %c0_i32 = arith.constant 0 : i32
    %c0_i32_0 = arith.constant 0 : i32
    %c0_i32_1 = arith.constant 0 : i32
    return %c0_i32, %c0_i32_0 : i32, i32
  }
  func.func @transform_5(%arg0: i32) -> (i32, i32) {
    %c0_i32 = arith.constant 0 : i32
    %c0_i32_0 = arith.constant 0 : i32
    %c0_i32_1 = arith.constant 0 : i32
    return %c0_i32, %c0_i32_0 : i32, i32
  }
  func.func @transform_6(%arg0: i32) -> (i32, i32) {
    %c0_i32 = arith.constant 0 : i32
    %c0_i32_0 = arith.constant 0 : i32
    %c0_i32_1 = arith.constant 0 : i32
    return %c0_i32, %c0_i32_0 : i32, i32
  }
  func.func @transform_7(%arg0: i32) -> (i32, i32) {
    %c0_i32 = arith.constant 0 : i32
    %c0_i32_0 = arith.constant 0 : i32
    %c0_i32_1 = arith.constant 0 : i32
    return %c0_i32, %c0_i32_0 : i32, i32
  }
  func.func @transform_8(%arg0: i32) -> (i32, i32) {
    %c0_i32 = arith.constant 0 : i32
    %c0_i32_0 = arith.constant 0 : i32
    %c0_i32_1 = arith.constant 0 : i32
    return %c0_i32, %c0_i32_0 : i32, i32
  }
  func.func @transform_9(%arg0: i32) -> (i32, i32) {
    %c0_i32 = arith.constant 0 : i32
    %c0_i32_0 = arith.constant 0 : i32
    %c0_i32_1 = arith.constant 0 : i32
    return %c0_i32, %c0_i32_0 : i32, i32
  }
  func.func @transform_10(%arg0: i32) -> (i32, i32) {
    %c0_i32 = arith.constant 0 : i32
    %c0_i32_0 = arith.constant 0 : i32
    %c0_i32_1 = arith.constant 0 : i32
    return %c0_i32, %c0_i32_0 : i32, i32
  }
  func.func @transform_11(%arg0: i32) -> (i32, i32) {
    %c0_i32 = arith.constant 0 : i32
    %c0_i32_0 = arith.constant 0 : i32
    %c0_i32_1 = arith.constant 0 : i32
    return %c0_i32, %c0_i32_0 : i32, i32
  }
  func.func @transform_12(%arg0: i32) -> (i32, i32) {
    %c0_i32 = arith.constant 0 : i32
    %c0_i32_0 = arith.constant 0 : i32
    %c0_i32_1 = arith.constant 0 : i32
    return %c0_i32, %c0_i32_0 : i32, i32
  }
  func.func @transform_13(%arg0: i32) -> (i32, i32) {
    %c0_i32 = arith.constant 0 : i32
    %c0_i32_0 = arith.constant 0 : i32
    return %arg0, %c0_i32 : i32, i32
  }
}

module attributes {stable_mosaic.version = 11 : i64} {
  func.func @_fused_cross_connector_kernel(%arg0: i32, %arg1: memref<32x64xf32, #tpu.memory_space<vmem>>, %arg2: memref<64x128xf32, #tpu.memory_space<vmem>>, %arg3: memref<1x128xf32, #tpu.memory_space<vmem>>, %arg4: memref<128x128xf32, #tpu.memory_space<vmem>>, %arg5: memref<1x128xf32, #tpu.memory_space<vmem>>, %arg6: memref<128x128xf32, #tpu.memory_space<vmem>>, %arg7: memref<1x128xf32, #tpu.memory_space<vmem>>, %arg8: memref<512x128xf32, #tpu.memory_space<vmem>>, %arg9: memref<1x128xf32, #tpu.memory_space<vmem>>, %arg10: memref<128x128xf32, #tpu.memory_space<vmem>>, %arg11: memref<1x128xf32, #tpu.memory_space<vmem>>, %arg12: memref<128x128xf32, #tpu.memory_space<vmem>>, %arg13: memref<1x128xf32, #tpu.memory_space<vmem>>, %arg14: memref<8x128xf32, #tpu.memory_space<vmem>>) attributes {dimension_semantics = [#tpu.dimension_semantics<parallel>], iteration_bounds = array<i64: 1>, scalar_prefetch = 0 : i64, scratch_operands = 0 : i64, tpu.core_type = #tpu.core_type<tc>, window_params = [{transform_indices = @transform_0, window_bounds = array<i64: 32, 64>}, {pipeline_mode = #tpu.pipeline_mode<synchronous>, transform_indices = @transform_1, window_bounds = array<i64: 64, 128>}, {pipeline_mode = #tpu.pipeline_mode<synchronous>, transform_indices = @transform_2, window_bounds = array<i64: 1, 128>}, {pipeline_mode = #tpu.pipeline_mode<synchronous>, transform_indices = @transform_3, window_bounds = array<i64: 128, 128>}, {pipeline_mode = #tpu.pipeline_mode<synchronous>, transform_indices = @transform_4, window_bounds = array<i64: 1, 128>}, {pipeline_mode = #tpu.pipeline_mode<synchronous>, transform_indices = @transform_5, window_bounds = array<i64: 128, 128>}, {pipeline_mode = #tpu.pipeline_mode<synchronous>, transform_indices = @transform_6, window_bounds = array<i64: 1, 128>}, {pipeline_mode = #tpu.pipeline_mode<synchronous>, transform_indices = @transform_7, window_bounds = array<i64: 512, 128>}, {pipeline_mode = #tpu.pipeline_mode<synchronous>, transform_indices = @transform_8, window_bounds = array<i64: 1, 128>}, {pipeline_mode = #tpu.pipeline_mode<synchronous>, transform_indices = @transform_9, window_bounds = array<i64: 128, 128>}, {pipeline_mode = #tpu.pipeline_mode<synchronous>, transform_indices = @transform_10, window_bounds = array<i64: 1, 128>}, {pipeline_mode = #tpu.pipeline_mode<synchronous>, transform_indices = @transform_11, window_bounds = array<i64: 128, 128>}, {pipeline_mode = #tpu.pipeline_mode<synchronous>, transform_indices = @transform_12, window_bounds = array<i64: 1, 128>}, {transform_indices = @transform_13, window_bounds = array<i64: 8, 128>}]} {
    %c0 = arith.constant 0 : index
    %c0_0 = arith.constant 0 : index
    %0 = vector.load %arg1[%c0, %c0_0] : memref<32x64xf32, #tpu.memory_space<vmem>>, vector<32x64xf32>
    %c0_1 = arith.constant 0 : index
    %c0_2 = arith.constant 0 : index
    %1 = vector.load %arg2[%c0_1, %c0_2] : memref<64x128xf32, #tpu.memory_space<vmem>>, vector<64x128xf32>
    %cst = arith.constant dense<0.000000e+00> : vector<32x128xf32>
    %2 = tpu.matmul %0, %1, %cst {dimension_numbers = #tpu.dot_dimension_numbers<[1], [0], [0], [1], [0, 0, 1, 1], [], []>} : vector<32x64xf32>, vector<64x128xf32>, vector<32x128xf32> -> vector<32x128xf32>
    %c0_3 = arith.constant 0 : index
    %c0_4 = arith.constant 0 : index
    %3 = vector.load %arg3[%c0_3, %c0_4] : memref<1x128xf32, #tpu.memory_space<vmem>>, vector<1x128xf32>
    %4 = vector.broadcast %3 : vector<1x128xf32> to vector<32x128xf32>
    %5 = arith.addf %2, %4 : vector<32x128xf32>
    %6 = arith.negf %5 : vector<32x128xf32>
    %7 = math.exp %6 : vector<32x128xf32>
    %cst_5 = arith.constant 1.000000e+00 : f32
    %8 = vector.broadcast %cst_5 : f32 to vector<32x128xf32>
    %9 = arith.addf %8, %7 : vector<32x128xf32>
    %10 = arith.divf %8, %9 : vector<32x128xf32>
    %c0_6 = arith.constant 0 : index
    %c0_7 = arith.constant 0 : index
    %11 = vector.load %arg4[%c0_6, %c0_7] : memref<128x128xf32, #tpu.memory_space<vmem>>, vector<128x128xf32>
    %cst_8 = arith.constant dense<0.000000e+00> : vector<32x128xf32>
    %12 = tpu.matmul %10, %11, %cst_8 {dimension_numbers = #tpu.dot_dimension_numbers<[1], [0], [0], [1], [0, 0, 1, 1], [], []>} : vector<32x128xf32>, vector<128x128xf32>, vector<32x128xf32> -> vector<32x128xf32>
    %c0_9 = arith.constant 0 : index
    %c0_10 = arith.constant 0 : index
    %13 = vector.load %arg5[%c0_9, %c0_10] : memref<1x128xf32, #tpu.memory_space<vmem>>, vector<1x128xf32>
    %14 = vector.broadcast %13 : vector<1x128xf32> to vector<32x128xf32>
    %15 = arith.addf %12, %14 : vector<32x128xf32>
    %16 = arith.negf %15 : vector<32x128xf32>
    %17 = math.exp %16 : vector<32x128xf32>
    %cst_11 = arith.constant 1.000000e+00 : f32
    %18 = vector.broadcast %cst_11 : f32 to vector<32x128xf32>
    %19 = arith.addf %18, %17 : vector<32x128xf32>
    %20 = arith.divf %18, %19 : vector<32x128xf32>
    %c0_12 = arith.constant 0 : index
    %c0_13 = arith.constant 0 : index
    %21 = vector.load %arg6[%c0_12, %c0_13] : memref<128x128xf32, #tpu.memory_space<vmem>>, vector<128x128xf32>
    %cst_14 = arith.constant dense<0.000000e+00> : vector<32x128xf32>
    %22 = tpu.matmul %20, %21, %cst_14 {dimension_numbers = #tpu.dot_dimension_numbers<[1], [0], [0], [1], [0, 0, 1, 1], [], []>} : vector<32x128xf32>, vector<128x128xf32>, vector<32x128xf32> -> vector<32x128xf32>
    %c0_15 = arith.constant 0 : index
    %c0_16 = arith.constant 0 : index
    %23 = vector.load %arg7[%c0_15, %c0_16] : memref<1x128xf32, #tpu.memory_space<vmem>>, vector<1x128xf32>
    %24 = vector.broadcast %23 : vector<1x128xf32> to vector<32x128xf32>
    %25 = arith.addf %22, %24 : vector<32x128xf32>
    %26 = arith.negf %25 : vector<32x128xf32>
    %27 = math.exp %26 : vector<32x128xf32>
    %cst_17 = arith.constant 1.000000e+00 : f32
    %28 = vector.broadcast %cst_17 : f32 to vector<32x128xf32>
    %29 = arith.addf %28, %27 : vector<32x128xf32>
    %30 = arith.divf %28, %29 : vector<32x128xf32>
    %31 = vector.extract_strided_slice %30 {offsets = [0, 0], sizes = [8, 128], strides = [1, 1]} : vector<32x128xf32> to vector<8x128xf32>
    %c0_18 = arith.constant 0 : index
    %c0_19 = arith.constant 0 : index
    %32 = vector.load %arg8[%c0_18, %c0_19] : memref<512x128xf32, #tpu.memory_space<vmem>>, vector<128x128xf32>
    %cst_20 = arith.constant dense<0.000000e+00> : vector<8x128xf32>
    %33 = tpu.matmul %31, %32, %cst_20 {dimension_numbers = #tpu.dot_dimension_numbers<[1], [0], [0], [1], [0, 0, 1, 1], [], []>} : vector<8x128xf32>, vector<128x128xf32>, vector<8x128xf32> -> vector<8x128xf32>
    %34 = vector.extract_strided_slice %30 {offsets = [8, 0], sizes = [8, 128], strides = [1, 1]} : vector<32x128xf32> to vector<8x128xf32>
    %c128 = arith.constant 128 : index
    %c0_21 = arith.constant 0 : index
    %35 = vector.load %arg8[%c128, %c0_21] : memref<512x128xf32, #tpu.memory_space<vmem>>, vector<128x128xf32>
    %cst_22 = arith.constant dense<0.000000e+00> : vector<8x128xf32>
    %36 = tpu.matmul %34, %35, %cst_22 {dimension_numbers = #tpu.dot_dimension_numbers<[1], [0], [0], [1], [0, 0, 1, 1], [], []>} : vector<8x128xf32>, vector<128x128xf32>, vector<8x128xf32> -> vector<8x128xf32>
    %37 = arith.addf %33, %36 : vector<8x128xf32>
    %38 = vector.extract_strided_slice %30 {offsets = [16, 0], sizes = [8, 128], strides = [1, 1]} : vector<32x128xf32> to vector<8x128xf32>
    %c256 = arith.constant 256 : index
    %c0_23 = arith.constant 0 : index
    %39 = vector.load %arg8[%c256, %c0_23] : memref<512x128xf32, #tpu.memory_space<vmem>>, vector<128x128xf32>
    %cst_24 = arith.constant dense<0.000000e+00> : vector<8x128xf32>
    %40 = tpu.matmul %38, %39, %cst_24 {dimension_numbers = #tpu.dot_dimension_numbers<[1], [0], [0], [1], [0, 0, 1, 1], [], []>} : vector<8x128xf32>, vector<128x128xf32>, vector<8x128xf32> -> vector<8x128xf32>
    %41 = arith.addf %37, %40 : vector<8x128xf32>
    %42 = vector.extract_strided_slice %30 {offsets = [24, 0], sizes = [8, 128], strides = [1, 1]} : vector<32x128xf32> to vector<8x128xf32>
    %c384 = arith.constant 384 : index
    %c0_25 = arith.constant 0 : index
    %43 = vector.load %arg8[%c384, %c0_25] : memref<512x128xf32, #tpu.memory_space<vmem>>, vector<128x128xf32>
    %cst_26 = arith.constant dense<0.000000e+00> : vector<8x128xf32>
    %44 = tpu.matmul %42, %43, %cst_26 {dimension_numbers = #tpu.dot_dimension_numbers<[1], [0], [0], [1], [0, 0, 1, 1], [], []>} : vector<8x128xf32>, vector<128x128xf32>, vector<8x128xf32> -> vector<8x128xf32>
    %45 = arith.addf %41, %44 : vector<8x128xf32>
    %c0_27 = arith.constant 0 : index
    %c0_28 = arith.constant 0 : index
    %46 = vector.load %arg9[%c0_27, %c0_28] : memref<1x128xf32, #tpu.memory_space<vmem>>, vector<1x128xf32>
    %47 = vector.broadcast %46 : vector<1x128xf32> to vector<8x128xf32>
    %48 = arith.addf %45, %47 : vector<8x128xf32>
    %49 = arith.negf %48 : vector<8x128xf32>
    %50 = math.exp %49 : vector<8x128xf32>
    %cst_29 = arith.constant 1.000000e+00 : f32
    %51 = vector.broadcast %cst_29 : f32 to vector<8x128xf32>
    %52 = arith.addf %51, %50 : vector<8x128xf32>
    %53 = arith.divf %51, %52 : vector<8x128xf32>
    %c0_30 = arith.constant 0 : index
    %c0_31 = arith.constant 0 : index
    %54 = vector.load %arg10[%c0_30, %c0_31] : memref<128x128xf32, #tpu.memory_space<vmem>>, vector<128x128xf32>
    %cst_32 = arith.constant dense<0.000000e+00> : vector<8x128xf32>
    %55 = tpu.matmul %53, %54, %cst_32 {dimension_numbers = #tpu.dot_dimension_numbers<[1], [0], [0], [1], [0, 0, 1, 1], [], []>} : vector<8x128xf32>, vector<128x128xf32>, vector<8x128xf32> -> vector<8x128xf32>
    %c0_33 = arith.constant 0 : index
    %c0_34 = arith.constant 0 : index
    %56 = vector.load %arg11[%c0_33, %c0_34] : memref<1x128xf32, #tpu.memory_space<vmem>>, vector<1x128xf32>
    %57 = vector.broadcast %56 : vector<1x128xf32> to vector<8x128xf32>
    %58 = arith.addf %55, %57 : vector<8x128xf32>
    %59 = arith.negf %58 : vector<8x128xf32>
    %60 = math.exp %59 : vector<8x128xf32>
    %cst_35 = arith.constant 1.000000e+00 : f32
    %61 = vector.broadcast %cst_35 : f32 to vector<8x128xf32>
    %62 = arith.addf %61, %60 : vector<8x128xf32>
    %63 = arith.divf %61, %62 : vector<8x128xf32>
    %c0_36 = arith.constant 0 : index
    %c0_37 = arith.constant 0 : index
    %64 = vector.load %arg12[%c0_36, %c0_37] : memref<128x128xf32, #tpu.memory_space<vmem>>, vector<128x128xf32>
    %cst_38 = arith.constant dense<0.000000e+00> : vector<8x128xf32>
    %65 = tpu.matmul %63, %64, %cst_38 {dimension_numbers = #tpu.dot_dimension_numbers<[1], [0], [0], [1], [0, 0, 1, 1], [], []>} : vector<8x128xf32>, vector<128x128xf32>, vector<8x128xf32> -> vector<8x128xf32>
    %c0_39 = arith.constant 0 : index
    %c0_40 = arith.constant 0 : index
    %66 = vector.load %arg13[%c0_39, %c0_40] : memref<1x128xf32, #tpu.memory_space<vmem>>, vector<1x128xf32>
    %67 = vector.broadcast %66 : vector<1x128xf32> to vector<8x128xf32>
    %68 = arith.addf %65, %67 : vector<8x128xf32>
    %c0_41 = arith.constant 0 : index
    %c0_42 = arith.constant 0 : index
    %69 = vector.load %arg14[%c0_41, %c0_42] : memref<8x128xf32, #tpu.memory_space<vmem>>, vector<8x128xf32>
    tpu.vector_store %arg14[%c0_41, %c0_42], %68 {strides = array<i32>} : memref<8x128xf32, #tpu.memory_space<vmem>>, vector<8x128xf32>,
    return
  }
  func.func @transform_0(%arg0: i32) -> (i32, i32) {
    %c0_i32 = arith.constant 0 : i32
    %c0_i32_0 = arith.constant 0 : i32
    return %arg0, %c0_i32 : i32, i32
  }
  func.func @transform_1(%arg0: i32) -> (i32, i32) {
    %c0_i32 = arith.constant 0 : i32
    %c0_i32_0 = arith.constant 0 : i32
    %c0_i32_1 = arith.constant 0 : i32
    return %c0_i32, %c0_i32_0 : i32, i32
  }
  func.func @transform_2(%arg0: i32) -> (i32, i32) {
    %c0_i32 = arith.constant 0 : i32
    %c0_i32_0 = arith.constant 0 : i32
    %c0_i32_1 = arith.constant 0 : i32
    return %c0_i32, %c0_i32_0 : i32, i32
  }
  func.func @transform_3(%arg0: i32) -> (i32, i32) {
    %c0_i32 = arith.constant 0 : i32
    %c0_i32_0 = arith.constant 0 : i32
    %c0_i32_1 = arith.constant 0 : i32
    return %c0_i32, %c0_i32_0 : i32, i32
  }
  func.func @transform_4(%arg0: i32) -> (i32, i32) {
    %c0_i32 = arith.constant 0 : i32
    %c0_i32_0 = arith.constant 0 : i32
    %c0_i32_1 = arith.constant 0 : i32
    return %c0_i32, %c0_i32_0 : i32, i32
  }
  func.func @transform_5(%arg0: i32) -> (i32, i32) {
    %c0_i32 = arith.constant 0 : i32
    %c0_i32_0 = arith.constant 0 : i32
    %c0_i32_1 = arith.constant 0 : i32
    return %c0_i32, %c0_i32_0 : i32, i32
  }
  func.func @transform_6(%arg0: i32) -> (i32, i32) {
    %c0_i32 = arith.constant 0 : i32
    %c0_i32_0 = arith.constant 0 : i32
    %c0_i32_1 = arith.constant 0 : i32
    return %c0_i32, %c0_i32_0 : i32, i32
  }
  func.func @transform_7(%arg0: i32) -> (i32, i32) {
    %c0_i32 = arith.constant 0 : i32
    %c0_i32_0 = arith.constant 0 : i32
    %c0_i32_1 = arith.constant 0 : i32
    return %c0_i32, %c0_i32_0 : i32, i32
  }
  func.func @transform_8(%arg0: i32) -> (i32, i32) {
    %c0_i32 = arith.constant 0 : i32
    %c0_i32_0 = arith.constant 0 : i32
    %c0_i32_1 = arith.constant 0 : i32
    return %c0_i32, %c0_i32_0 : i32, i32
  }
  func.func @transform_9(%arg0: i32) -> (i32, i32) {
    %c0_i32 = arith.constant 0 : i32
    %c0_i32_0 = arith.constant 0 : i32
    %c0_i32_1 = arith.constant 0 : i32
    return %c0_i32, %c0_i32_0 : i32, i32
  }
  func.func @transform_10(%arg0: i32) -> (i32, i32) {
    %c0_i32 = arith.constant 0 : i32
    %c0_i32_0 = arith.constant 0 : i32
    %c0_i32_1 = arith.constant 0 : i32
    return %c0_i32, %c0_i32_0 : i32, i32
  }
  func.func @transform_11(%arg0: i32) -> (i32, i32) {
    %c0_i32 = arith.constant 0 : i32
    %c0_i32_0 = arith.constant 0 : i32
    %c0_i32_1 = arith.constant 0 : i32
    return %c0_i32, %c0_i32_0 : i32, i32
  }
  func.func @transform_12(%arg0: i32) -> (i32, i32) {
    %c0_i32 = arith.constant 0 : i32
    %c0_i32_0 = arith.constant 0 : i32
    %c0_i32_1 = arith.constant 0 : i32
    return %c0_i32, %c0_i32_0 : i32, i32
  }
  func.func @transform_13(%arg0: i32) -> (i32, i32) {
    %c0_i32 = arith.constant 0 : i32
    %c0_i32_0 = arith.constant 0 : i32
    return %arg0, %c0_i32 : i32, i32
  }
}

</mosaic_0001>

<llo_original>
// kernel: _forward_impl.1
$region0: #{_forward_impl.1}
  #allocation0 [shape = 'u32[]', space=smem, size = 0x4, offset = 0x4, fixed_abs, tag = 'smem constant byte address 0x4 - core index']
  #allocation1 [shape = 'u32[144,128]{1,0:T(1,128)}', space=vmem, size = 0x12000, scoped, tag = 'internal scratch']
  %s0 = inlined_call_operand.vmem [shape: f32[32,64], index: 0, kind: input, shape index: {}]
  %s1 = inlined_call_operand.vmem [shape: f32[64,128], index: 1, kind: input, shape index: {}]
  %s2 = inlined_call_operand.vmem [shape: f32[1,128], index: 2, kind: input, shape index: {}]
  %s3 = inlined_call_operand.vmem [shape: f32[128,128], index: 3, kind: input, shape index: {}]
  %s4 = inlined_call_operand.vmem [shape: f32[1,128], index: 4, kind: input, shape index: {}]
  %s5 = inlined_call_operand.vmem [shape: f32[128,128], index: 5, kind: input, shape index: {}]
  %s6 = inlined_call_operand.vmem [shape: f32[1,128], index: 6, kind: input, shape index: {}]
  %s7 = inlined_call_operand.vmem [shape: f32[512,128], index: 7, kind: input, shape index: {}]
  %s8 = inlined_call_operand.vmem [shape: f32[1,128], index: 8, kind: input, shape index: {}]
  %s9 = inlined_call_operand.vmem [shape: f32[128,128], index: 9, kind: input, shape index: {}]
  %s10 = inlined_call_operand.vmem [shape: f32[1,128], index: 10, kind: input, shape index: {}]
  %s11 = inlined_call_operand.vmem [shape: f32[128,128], index: 11, kind: input, shape index: {}]
  %s12 = inlined_call_operand.vmem [shape: f32[1,128], index: 12, kind: input, shape index: {}]
  %s13 = inlined_call_operand.vmem [shape: f32[8,128], index: 13, kind: output, shape index: {}]
  %s14 = sld [smem:[#allocation0]]
  $region62: #{_forward_impl.1} parent=0
    _
  %s16 = ssub.s32 1, %s14
  %s17 = scalar_select 0, %s16, %s14
  // Predicated region
  $region2: #{_forward_impl.1} parent=0 // pred_check
    _
  $region3: #{_forward_impl.1} parent=0 // pred_check_branch
    %19 = sbr.rel (0) target = $region5
  $region4: #{_forward_impl.1} parent=0 // pred_region
    _
  $region5: #{_forward_impl.1} parent=0 // pred_fallthru
    _
  // Predicated region
  $region6: #{_forward_impl.1} parent=0 // pred_check
    _
  $region7: #{_forward_impl.1} parent=0 // pred_check_branch
    %21 = sbr.rel (0) target = $region9
  $region8: #{_forward_impl.1} parent=0 // pred_region
    _
  $region9: #{_forward_impl.1} parent=0 // pred_fallthru
    _
  // Predicated region
  $region10: #{_forward_impl.1} parent=0 // pred_check
    _
  $region11: #{_forward_impl.1} parent=0 // pred_check_branch
    %23 = sbr.rel (0) target = $region13
  $region12: #{_forward_impl.1} parent=0 // pred_region
    _
  $region13: #{_forward_impl.1} parent=0 // pred_fallthru
    _
  // Predicated region
  $region14: #{_forward_impl.1} parent=0 // pred_check
    _
  $region15: #{_forward_impl.1} parent=0 // pred_check_branch
    %25 = sbr.rel (0) target = $region17
  $region16: #{_forward_impl.1} parent=0 // pred_region
    _
  $region17: #{_forward_impl.1} parent=0 // pred_fallthru
    _
  // Predicated region
  $region18: #{_forward_impl.1} parent=0 // pred_check
    _
  $region19: #{_forward_impl.1} parent=0 // pred_check_branch
    %27 = sbr.rel (0) target = $region21
  $region20: #{_forward_impl.1} parent=0 // pred_region
    _
  $region21: #{_forward_impl.1} parent=0 // pred_fallthru
    _
  // Predicated region
  $region22: #{_forward_impl.1} parent=0 // pred_check
    _
  $region23: #{_forward_impl.1} parent=0 // pred_check_branch
    %29 = sbr.rel (0) target = $region25
  $region24: #{_forward_impl.1} parent=0 // pred_region
    _
  $region25: #{_forward_impl.1} parent=0 // pred_fallthru
    _
  // Predicated region
  $region26: #{_forward_impl.1} parent=0 // pred_check
    _
  $region27: #{_forward_impl.1} parent=0 // pred_check_branch
    %31 = sbr.rel (0) target = $region29
  $region28: #{_forward_impl.1} parent=0 // pred_region
    _
  $region29: #{_forward_impl.1} parent=0 // pred_fallthru
    _
  // Predicated region
  $region30: #{_forward_impl.1} parent=0 // pred_check
    _
  $region31: #{_forward_impl.1} parent=0 // pred_check_branch
    %33 = sbr.rel (0) target = $region33
  $region32: #{_forward_impl.1} parent=0 // pred_region
    _
  $region33: #{_forward_impl.1} parent=0 // pred_fallthru
    _
  // Predicated region
  $region34: #{_forward_impl.1} parent=0 // pred_check
    _
  $region35: #{_forward_impl.1} parent=0 // pred_check_branch
    %35 = sbr.rel (0) target = $region37
  $region36: #{_forward_impl.1} parent=0 // pred_region
    _
  $region37: #{_forward_impl.1} parent=0 // pred_fallthru
    _
  // Predicated region
  $region38: #{_forward_impl.1} parent=0 // pred_check
    _
  $region39: #{_forward_impl.1} parent=0 // pred_check_branch
    %37 = sbr.rel (0) target = $region41
  $region40: #{_forward_impl.1} parent=0 // pred_region
    _
  $region41: #{_forward_impl.1} parent=0 // pred_fallthru
    _
  // Predicated region
  $region42: #{_forward_impl.1} parent=0 // pred_check
    _
  $region43: #{_forward_impl.1} parent=0 // pred_check_branch
    %39 = sbr.rel (0) target = $region45
  $region44: #{_forward_impl.1} parent=0 // pred_region
    _
  $region45: #{_forward_impl.1} parent=0 // pred_fallthru
    _
  // Predicated region
  $region46: #{_forward_impl.1} parent=0 // pred_check
    _
  $region47: #{_forward_impl.1} parent=0 // pred_check_branch
    %41 = sbr.rel (0) target = $region49
  $region48: #{_forward_impl.1} parent=0 // pred_region
    _
  $region49: #{_forward_impl.1} parent=0 // pred_fallthru
    _
  // Predicated region
  $region50: #{_forward_impl.1} parent=0 // pred_check
    _
  $region51: #{_forward_impl.1} parent=0 // pred_check_branch
    %43 = sbr.rel (0) target = $region53
  $region52: #{_forward_impl.1} parent=0 // pred_region
    _
  $region53: #{_forward_impl.1} parent=0 // pred_fallthru
    _
  %v44 = vld [vmem:[%s0] sm:$0xff]
  %v45 = vld [vmem:[%s0 + $0x8] sm:$0xff]
  %v46 = vld [vmem:[%s0 + $0x10] sm:$0xff]
  %v47 = vld [vmem:[%s0 + $0x18] sm:$0xff]
  %v48 = vld [vmem:[%s1] sm:$0xff]
  %v49 = vld [vmem:[%s1 + $0x8] sm:$0xff]
  %v50 = vld [vmem:[%s1 + $0x10] sm:$0xff]
  %v51 = vld [vmem:[%s1 + $0x18] sm:$0xff]
  %v52 = vld [vmem:[%s1 + $0x20] sm:$0xff]
  %v53 = vld [vmem:[%s1 + $0x28] sm:$0xff]
  %v54 = vld [vmem:[%s1 + $0x30] sm:$0xff]
  %v55 = vld [vmem:[%s1 + $0x38] sm:$0xff]
  %v56 = vld [vmem:[%s2] sm:$0x1]
  %v58 = vlaneseq
  %v59 = vshrl.u32 %v58, 7
  %v60 = vsub.s32 0, %v59
  %v61 = vrot.slane %v56, %v60
  %vm63 = vcmask 523264
  %v65 = vsel %vm63, %v44, 0
  %v68 = vsel %vm63, %v45, 0
  %v71 = vsel %vm63, %v46, 0
  %v74 = vsel %vm63, %v47, 0
  %76 = vmatprep.subr.mxu0 0.0
  %77 = vmatpush1.msra.mxu0 0.0
  %78 = vmatprep.subr.mxu0 0.0
  %79 = vmatpush1.msra.mxu0 0.0
  %80 = vmatprep.subr.mxu0 0.0
  %81 = vmatpush1.msra.mxu0 0.0
  %82 = vmatprep.subr.mxu0 0.0
  %83 = vmatpush1.msra.mxu0 0.0
  %84 = vmatprep.subr.mxu0 0.0
  %85 = vmatpush1.msra.mxu0 0.0
  %86 = vmatprep.subr.mxu0 0.0
  %87 = vmatpush1.msra.mxu0 0.0
  %88 = vmatprep.subr.mxu0 0.0
  %89 = vmatpush1.msra.mxu0 0.0
  %90 = vmatprep.subr.mxu0 0.0
  %91 = vmatpush1.msra.mxu0 0.0
  %92 = vmatprep.subr.mxu0 0.0
  %93 = vmatpush1.msra.mxu0 %v55
  %94 = vmatprep.subr.mxu0 0.0
  %95 = vmatpush1.msra.mxu0 %v54
  %96 = vmatprep.subr.mxu0 0.0
  %97 = vmatpush1.msra.mxu0 %v53
  %98 = vmatprep.subr.mxu0 0.0
  %99 = vmatpush1.msra.mxu0 %v52
  %100 = vmatprep.subr.mxu0 0.0
  %101 = vmatpush1.msra.mxu0 %v51
  %102 = vmatprep.subr.mxu0 0.0
  %103 = vmatpush1.msra.mxu0 %v50
  %104 = vmatprep.subr.mxu0 0.0
  %105 = vmatpush1.msra.mxu0 %v49
  %106 = vmatprep.subr.mxu0 0.0
  %107 = vmatpush1.msra.mxu0 %v48
  %108 = vmatprep.subr.mxu0 0.0
  %109 = vmatpush2.msra.mxu0 0.0
  %110 = vmatprep.subr.mxu0 0.0
  %111 = vmatpush2.msra.mxu0 0.0
  %112 = vmatprep.subr.mxu0 0.0
  %113 = vmatpush2.msra.mxu0 0.0
  %114 = vmatprep.subr.mxu0 0.0
  %115 = vmatpush2.msra.mxu0 0.0
  %116 = vmatprep.subr.mxu0 0.0
  %117 = vmatpush2.msra.mxu0 0.0
  %118 = vmatprep.subr.mxu0 0.0
  %119 = vmatpush2.msra.mxu0 0.0
  %120 = vmatprep.subr.mxu0 0.0
  %121 = vmatpush2.msra.mxu0 0.0
  %122 = vmatprep.subr.mxu0 0.0
  %123 = vmatpush2.msra.mxu0 0.0
  %124 = vmatprep.subr.mxu0 0.0
  %125 = vmatpush2.msra.mxu0 0.0
  %126 = vmatprep.subr.mxu0 0.0
  %127 = vmatpush2.msra.mxu0 0.0
  %128 = vmatprep.subr.mxu0 0.0
  %129 = vmatpush2.msra.mxu0 0.0
  %130 = vmatprep.subr.mxu0 0.0
  %131 = vmatpush2.msra.mxu0 0.0
  %132 = vmatprep.subr.mxu0 0.0
  %133 = vmatpush2.msra.mxu0 0.0
  %134 = vmatprep.subr.mxu0 0.0
  %135 = vmatpush2.msra.mxu0 0.0
  %136 = vmatprep.subr.mxu0 0.0
  %137 = vmatpush2.msra.mxu0 0.0
  %138 = vmatprep.subr.mxu0 0.0
  %139 = vmatpush2.msra.mxu0 0.0
  %140 = vmatprep.mubr.f32.mxu0 0.0
  %141 = vmatmul.mubr.f32.gmra.mxu0 %v65
  %v142 = vpop.f32.mrf.mxu0
  %v143 = vadd.f32 %v61, %v142
  %v144 = vpop.f32.mrf.mxu0
  %145 = vmatprep.mubr.f32.mxu0 0.0
  %146 = vmatmul.mubr.f32.gmra.mxu0 %v68
  %v147 = vpop.f32.mrf.mxu0
  %v148 = vadd.f32 %v61, %v147
  %v149 = vpop.f32.mrf.mxu0
  %150 = vmatprep.mubr.f32.mxu0 0.0
  %151 = vmatmul.mubr.f32.gmra.mxu0 %v71
  %v152 = vpop.f32.mrf.mxu0
  %v153 = vadd.f32 %v61, %v152
  %v154 = vpop.f32.mrf.mxu0
  %155 = vmatprep.mubr.f32.mxu0 0.0
  %156 = vmatmul.mubr.f32.gmra.mxu0 %v74
  %v157 = vpop.f32.mrf.mxu0
  %v158 = vadd.f32 %v61, %v157
  %v159 = vpop.f32.mrf.mxu0
  %160 = vdwg.mxu0
  %v161 = vxor.u32 %v143, 2147483648
  %v162 = vxor.u32 %v148, 2147483648
  %v163 = vxor.u32 %v153, 2147483648
  %v164 = vxor.u32 %v158, 2147483648
  %v165 = vmul.f32 %v161, 1.442695
  %v166 = vpow.pop %v165
  %v167 = vmul.f32 %v162, 1.442695
  %v168 = vpow.pop %v167
  %v169 = vmul.f32 %v163, 1.442695
  %v170 = vpow.pop %v169
  %v171 = vmul.f32 %v164, 1.442695
  %v172 = vpow.pop %v171
  %v173 = vadd.f32 %v166, 1.0
  %v174 = vadd.f32 %v168, 1.0
  %v175 = vadd.f32 %v170, 1.0
  %v176 = vadd.f32 %v172, 1.0
  %v177 = vrcp.pop %v173
  %v178 = vmul.f32 1.0, %v177
  %v179 = vrcp.pop %v174
  %v180 = vmul.f32 1.0, %v179
  %v181 = vrcp.pop %v175
  %v182 = vmul.f32 1.0, %v181
  %v183 = vrcp.pop %v176
  %v184 = vmul.f32 1.0, %v183
  %v185 = vld [vmem:[%s3] sm:$0xff]
  %v186 = vld [vmem:[%s3 + $0x8] sm:$0xff]
  %v187 = vld [vmem:[%s3 + $0x10] sm:$0xff]
  %v188 = vld [vmem:[%s3 + $0x18] sm:$0xff]
  %v189 = vld [vmem:[%s3 + $0x20] sm:$0xff]
  %v190 = vld [vmem:[%s3 + $0x28] sm:$0xff]
  %v191 = vld [vmem:[%s3 + $0x30] sm:$0xff]
  %v192 = vld [vmem:[%s3 + $0x38] sm:$0xff]
  %v193 = vld [vmem:[%s3 + $0x40] sm:$0xff]
  %v194 = vld [vmem:[%s3 + $0x48] sm:$0xff]
  %v195 = vld [vmem:[%s3 + $0x50] sm:$0xff]
  %v196 = vld [vmem:[%s3 + $0x58] sm:$0xff]
  %v197 = vld [vmem:[%s3 + $0x60] sm:$0xff]
  %v198 = vld [vmem:[%s3 + $0x68] sm:$0xff]
  %v199 = vld [vmem:[%s3 + $0x70] sm:$0xff]
  %v200 = vld [vmem:[%s3 + $0x78] sm:$0xff]
  %v201 = vld [vmem:[%s4] sm:$0x1]
  %v203 = vlaneseq
  %v204 = vshrl.u32 %v203, 7
  %v205 = vsub.s32 0, %v204
  %v206 = vrot.slane %v201, %v205
  %208 = vmatprep.subr.mxu0 0.0
  %209 = vmatpush1.msra.mxu0 %v200
  %210 = vmatprep.subr.mxu0 0.0
  %211 = vmatpush1.msra.mxu0 %v199
  %212 = vmatprep.subr.mxu0 0.0
  %213 = vmatpush1.msra.mxu0 %v198
  %214 = vmatprep.subr.mxu0 0.0
  %215 = vmatpush1.msra.mxu0 %v197
  %216 = vmatprep.subr.mxu0 0.0
  %217 = vmatpush1.msra.mxu0 %v196
  %218 = vmatprep.subr.mxu0 0.0
  %219 = vmatpush1.msra.mxu0 %v195
  %220 = vmatprep.subr.mxu0 0.0
  %221 = vmatpush1.msra.mxu0 %v194
  %222 = vmatprep.subr.mxu0 0.0
  %223 = vmatpush1.msra.mxu0 %v193
  %224 = vmatprep.subr.mxu0 0.0
  %225 = vmatpush1.msra.mxu0 %v192
  %226 = vmatprep.subr.mxu0 0.0
  %227 = vmatpush1.msra.mxu0 %v191
  %228 = vmatprep.subr.mxu0 0.0
  %229 = vmatpush1.msra.mxu0 %v190
  %230 = vmatprep.subr.mxu0 0.0
  %231 = vmatpush1.msra.mxu0 %v189
  %232 = vmatprep.subr.mxu0 0.0
  %233 = vmatpush1.msra.mxu0 %v188
  %234 = vmatprep.subr.mxu0 0.0
  %235 = vmatpush1.msra.mxu0 %v187
  %236 = vmatprep.subr.mxu0 0.0
  %237 = vmatpush1.msra.mxu0 %v186
  %238 = vmatprep.subr.mxu0 0.0
  %239 = vmatpush1.msra.mxu0 %v185
  %240 = vmatprep.subr.mxu0 0.0
  %241 = vmatpush2.msra.mxu0 0.0
  %242 = vmatprep.subr.mxu0 0.0
  %243 = vmatpush2.msra.mxu0 0.0
  %244 = vmatprep.subr.mxu0 0.0
  %245 = vmatpush2.msra.mxu0 0.0
  %246 = vmatprep.subr.mxu0 0.0
  %247 = vmatpush2.msra.mxu0 0.0
  %248 = vmatprep.subr.mxu0 0.0
  %249 = vmatpush2.msra.mxu0 0.0
  %250 = vmatprep.subr.mxu0 0.0
  %251 = vmatpush2.msra.mxu0 0.0
  %252 = vmatprep.subr.mxu0 0.0
  %253 = vmatpush2.msra.mxu0 0.0
  %254 = vmatprep.subr.mxu0 0.0
  %255 = vmatpush2.msra.mxu0 0.0
  %256 = vmatprep.subr.mxu0 0.0
  %257 = vmatpush2.msra.mxu0 0.0
  %258 = vmatprep.subr.mxu0 0.0
  %259 = vmatpush2.msra.mxu0 0.0
  %260 = vmatprep.subr.mxu0 0.0
  %261 = vmatpush2.msra.mxu0 0.0
  %262 = vmatprep.subr.mxu0 0.0
  %263 = vmatpush2.msra.mxu0 0.0
  %264 = vmatprep.subr.mxu0 0.0
  %265 = vmatpush2.msra.mxu0 0.0
  %266 = vmatprep.subr.mxu0 0.0
  %267 = vmatpush2.msra.mxu0 0.0
  %268 = vmatprep.subr.mxu0 0.0
  %269 = vmatpush2.msra.mxu0 0.0
  %270 = vmatprep.subr.mxu0 0.0
  %271 = vmatpush2.msra.mxu0 0.0
  %272 = vmatprep.mubr.f32.mxu0 0.0
  %273 = vmatmul.mubr.f32.gmra.mxu0 %v178
  %v274 = vpop.f32.mrf.mxu0
  %v275 = vadd.f32 %v206, %v274
  %v276 = vpop.f32.mrf.mxu0
  %277 = vmatprep.mubr.f32.mxu0 0.0
  %278 = vmatmul.mubr.f32.gmra.mxu0 %v180
  %v279 = vpop.f32.mrf.mxu0
  %v280 = vadd.f32 %v206, %v279
  %v281 = vpop.f32.mrf.mxu0
  %282 = vmatprep.mubr.f32.mxu0 0.0
  %283 = vmatmul.mubr.f32.gmra.mxu0 %v182
  %v284 = vpop.f32.mrf.mxu0
  %v285 = vadd.f32 %v206, %v284
  %v286 = vpop.f32.mrf.mxu0
  %287 = vmatprep.mubr.f32.mxu0 0.0
  %288 = vmatmul.mubr.f32.gmra.mxu0 %v184
  %v289 = vpop.f32.mrf.mxu0
  %v290 = vadd.f32 %v206, %v289
  %v291 = vpop.f32.mrf.mxu0
  %292 = vdwg.mxu0
  %v293 = vxor.u32 %v275, 2147483648
  %v294 = vxor.u32 %v280, 2147483648
  %v295 = vxor.u32 %v285, 2147483648
  %v296 = vxor.u32 %v290, 2147483648
  %v297 = vmul.f32 %v293, 1.442695
  %v298 = vpow.pop %v297
  %v299 = vmul.f32 %v294, 1.442695
  %v300 = vpow.pop %v299
  %v301 = vmul.f32 %v295, 1.442695
  %v302 = vpow.pop %v301
  %v303 = vmul.f32 %v296, 1.442695
  %v304 = vpow.pop %v303
  %v305 = vadd.f32 %v298, 1.0
  %v306 = vadd.f32 %v300, 1.0
  %v307 = vadd.f32 %v302, 1.0
  %v308 = vadd.f32 %v304, 1.0
  %v309 = vrcp.pop %v305
  %v310 = vmul.f32 1.0, %v309
  %v311 = vrcp.pop %v306
  %v312 = vmul.f32 1.0, %v311
  %v313 = vrcp.pop %v307
  %v314 = vmul.f32 1.0, %v313
  %v315 = vrcp.pop %v308
  %v316 = vmul.f32 1.0, %v315
  %v317 = vld [vmem:[%s5] sm:$0xff]
  %v318 = vld [vmem:[%s5 + $0x8] sm:$0xff]
  %v319 = vld [vmem:[%s5 + $0x10] sm:$0xff]
  %v320 = vld [vmem:[%s5 + $0x18] sm:$0xff]
  %v321 = vld [vmem:[%s5 + $0x20] sm:$0xff]
  %v322 = vld [vmem:[%s5 + $0x28] sm:$0xff]
  %v323 = vld [vmem:[%s5 + $0x30] sm:$0xff]
  %v324 = vld [vmem:[%s5 + $0x38] sm:$0xff]
  %v325 = vld [vmem:[%s5 + $0x40] sm:$0xff]
  %v326 = vld [vmem:[%s5 + $0x48] sm:$0xff]
  %v327 = vld [vmem:[%s5 + $0x50] sm:$0xff]
  %v328 = vld [vmem:[%s5 + $0x58] sm:$0xff]
  %v329 = vld [vmem:[%s5 + $0x60] sm:$0xff]
  %v330 = vld [vmem:[%s5 + $0x68] sm:$0xff]
  %v331 = vld [vmem:[%s5 + $0x70] sm:$0xff]
  %v332 = vld [vmem:[%s5 + $0x78] sm:$0xff]
  %v333 = vld [vmem:[%s6] sm:$0x1]
  %v335 = vlaneseq
  %v336 = vshrl.u32 %v335, 7
  %v337 = vsub.s32 0, %v336
  %v338 = vrot.slane %v333, %v337
  %340 = vmatprep.subr.mxu0 0.0
  %341 = vmatpush1.msra.mxu0 %v332
  %342 = vmatprep.subr.mxu0 0.0
  %343 = vmatpush1.msra.mxu0 %v331
  %344 = vmatprep.subr.mxu0 0.0
  %345 = vmatpush1.msra.mxu0 %v330
  %346 = vmatprep.subr.mxu0 0.0
  %347 = vmatpush1.msra.mxu0 %v329
  %348 = vmatprep.subr.mxu0 0.0
  %349 = vmatpush1.msra.mxu0 %v328
  %350 = vmatprep.subr.mxu0 0.0
  %351 = vmatpush1.msra.mxu0 %v327
  %352 = vmatprep.subr.mxu0 0.0
  %353 = vmatpush1.msra.mxu0 %v326
  %354 = vmatprep.subr.mxu0 0.0
  %355 = vmatpush1.msra.mxu0 %v325
  %356 = vmatprep.subr.mxu0 0.0
  %357 = vmatpush1.msra.mxu0 %v324
  %358 = vmatprep.subr.mxu0 0.0
  %359 = vmatpush1.msra.mxu0 %v323
  %360 = vmatprep.subr.mxu0 0.0
  %361 = vmatpush1.msra.mxu0 %v322
  %362 = vmatprep.subr.mxu0 0.0
  %363 = vmatpush1.msra.mxu0 %v321
  %364 = vmatprep.subr.mxu0 0.0
  %365 = vmatpush1.msra.mxu0 %v320
  %366 = vmatprep.subr.mxu0 0.0
  %367 = vmatpush1.msra.mxu0 %v319
  %368 = vmatprep.subr.mxu0 0.0
  %369 = vmatpush1.msra.mxu0 %v318
  %370 = vmatprep.subr.mxu0 0.0
  %371 = vmatpush1.msra.mxu0 %v317
  %372 = vmatprep.subr.mxu0 0.0
  %373 = vmatpush2.msra.mxu0 0.0
  %374 = vmatprep.subr.mxu0 0.0
  %375 = vmatpush2.msra.mxu0 0.0
  %376 = vmatprep.subr.mxu0 0.0
  %377 = vmatpush2.msra.mxu0 0.0
  %378 = vmatprep.subr.mxu0 0.0
  %379 = vmatpush2.msra.mxu0 0.0
  %380 = vmatprep.subr.mxu0 0.0
  %381 = vmatpush2.msra.mxu0 0.0
  %382 = vmatprep.subr.mxu0 0.0
  %383 = vmatpush2.msra.mxu0 0.0
  %384 = vmatprep.subr.mxu0 0.0
  %385 = vmatpush2.msra.mxu0 0.0
  %386 = vmatprep.subr.mxu0 0.0
  %387 = vmatpush2.msra.mxu0 0.0
  %388 = vmatprep.subr.mxu0 0.0
  %389 = vmatpush2.msra.mxu0 0.0
  %390 = vmatprep.subr.mxu0 0.0
  %391 = vmatpush2.msra.mxu0 0.0
  %392 = vmatprep.subr.mxu0 0.0
  %393 = vmatpush2.msra.mxu0 0.0
  %394 = vmatprep.subr.mxu0 0.0
  %395 = vmatpush2.msra.mxu0 0.0
  %396 = vmatprep.subr.mxu0 0.0
  %397 = vmatpush2.msra.mxu0 0.0
  %398 = vmatprep.subr.mxu0 0.0
  %399 = vmatpush2.msra.mxu0 0.0
  %400 = vmatprep.subr.mxu0 0.0
  %401 = vmatpush2.msra.mxu0 0.0
  %402 = vmatprep.subr.mxu0 0.0
  %403 = vmatpush2.msra.mxu0 0.0
  %404 = vmatprep.mubr.f32.mxu0 0.0
  %405 = vmatmul.mubr.f32.gmra.mxu0 %v310
  %v406 = vpop.f32.mrf.mxu0
  %v407 = vadd.f32 %v338, %v406
  %v408 = vpop.f32.mrf.mxu0
  %409 = vmatprep.mubr.f32.mxu0 0.0
  %410 = vmatmul.mubr.f32.gmra.mxu0 %v312
  %v411 = vpop.f32.mrf.mxu0
  %v412 = vadd.f32 %v338, %v411
  %v413 = vpop.f32.mrf.mxu0
  %414 = vmatprep.mubr.f32.mxu0 0.0
  %415 = vmatmul.mubr.f32.gmra.mxu0 %v314
  %v416 = vpop.f32.mrf.mxu0
  %v417 = vadd.f32 %v338, %v416
  %v418 = vpop.f32.mrf.mxu0
  %419 = vmatprep.mubr.f32.mxu0 0.0
  %420 = vmatmul.mubr.f32.gmra.mxu0 %v316
  %v421 = vpop.f32.mrf.mxu0
  %v422 = vadd.f32 %v338, %v421
  %v423 = vpop.f32.mrf.mxu0
  %424 = vdwg.mxu0
  %v425 = vxor.u32 %v407, 2147483648
  %v426 = vxor.u32 %v412, 2147483648
  %v427 = vxor.u32 %v417, 2147483648
  %v428 = vxor.u32 %v422, 2147483648
  %v429 = vmul.f32 %v425, 1.442695
  %v430 = vpow.pop %v429
  %v431 = vmul.f32 %v426, 1.442695
  %v432 = vpow.pop %v431
  %v433 = vmul.f32 %v427, 1.442695
  %v434 = vpow.pop %v433
  %v435 = vmul.f32 %v428, 1.442695
  %v436 = vpow.pop %v435
  %v437 = vadd.f32 %v430, 1.0
  %v438 = vadd.f32 %v432, 1.0
  %v439 = vadd.f32 %v434, 1.0
  %v440 = vadd.f32 %v436, 1.0
  %v441 = vrcp.pop %v437
  %v442 = vmul.f32 1.0, %v441
  %v443 = vrcp.pop %v438
  %v444 = vmul.f32 1.0, %v443
  %v445 = vrcp.pop %v439
  %v446 = vmul.f32 1.0, %v445
  %v447 = vrcp.pop %v440
  %v448 = vmul.f32 1.0, %v447
  %v449 = vld [vmem:[%s7] sm:$0xff]
  %v450 = vld [vmem:[%s7 + $0x8] sm:$0xff]
  %v451 = vld [vmem:[%s7 + $0x10] sm:$0xff]
  %v452 = vld [vmem:[%s7 + $0x18] sm:$0xff]
  %v453 = vld [vmem:[%s7 + $0x20] sm:$0xff]
  %v454 = vld [vmem:[%s7 + $0x28] sm:$0xff]
  %v455 = vld [vmem:[%s7 + $0x30] sm:$0xff]
  %v456 = vld [vmem:[%s7 + $0x38] sm:$0xff]
  %v457 = vld [vmem:[%s7 + $0x40] sm:$0xff]
  %v458 = vld [vmem:[%s7 + $0x48] sm:$0xff]
  %v459 = vld [vmem:[%s7 + $0x50] sm:$0xff]
  %v460 = vld [vmem:[%s7 + $0x58] sm:$0xff]
  %v461 = vld [vmem:[%s7 + $0x60] sm:$0xff]
  %v462 = vld [vmem:[%s7 + $0x68] sm:$0xff]
  %v463 = vld [vmem:[%s7 + $0x70] sm:$0xff]
  %v464 = vld [vmem:[%s7 + $0x78] sm:$0xff]
  %v465 = vld [vmem:[%s7 + $0x80] sm:$0xff]
  %v466 = vld [vmem:[%s7 + $0x88] sm:$0xff]
  %v467 = vld [vmem:[%s7 + $0x90] sm:$0xff]
  %v468 = vld [vmem:[%s7 + $0x98] sm:$0xff]
  %v469 = vld [vmem:[%s7 + $0xa0] sm:$0xff]
  %v470 = vld [vmem:[%s7 + $0xa8] sm:$0xff]
  %v471 = vld [vmem:[%s7 + $0xb0] sm:$0xff]
  %v472 = vld [vmem:[%s7 + $0xb8] sm:$0xff]
  %v473 = vld [vmem:[%s7 + $0xc0] sm:$0xff]
  %v474 = vld [vmem:[%s7 + $0xc8] sm:$0xff]
  %v475 = vld [vmem:[%s7 + $0xd0] sm:$0xff]
  %v476 = vld [vmem:[%s7 + $0xd8] sm:$0xff]
  %v477 = vld [vmem:[%s7 + $0xe0] sm:$0xff]
  %v478 = vld [vmem:[%s7 + $0xe8] sm:$0xff]
  %v479 = vld [vmem:[%s7 + $0xf0] sm:$0xff]
  %v480 = vld [vmem:[%s7 + $0xf8] sm:$0xff]
  %481 = vmatprep.subr.mxu0 0.0
  %482 = vmatpush1.msra.mxu0 %v480
  %483 = vmatprep.subr.mxu0 0.0
  %484 = vmatpush1.msra.mxu0 %v479
  %485 = vmatprep.subr.mxu0 0.0
  %486 = vmatpush1.msra.mxu0 %v478
  %487 = vmatprep.subr.mxu0 0.0
  %488 = vmatpush1.msra.mxu0 %v477
  %489 = vmatprep.subr.mxu0 0.0
  %490 = vmatpush1.msra.mxu0 %v476
  %491 = vmatprep.subr.mxu0 0.0
  %492 = vmatpush1.msra.mxu0 %v475
  %493 = vmatprep.subr.mxu0 0.0
  %494 = vmatpush1.msra.mxu0 %v474
  %495 = vmatprep.subr.mxu0 0.0
  %496 = vmatpush1.msra.mxu0 %v473
  %497 = vmatprep.subr.mxu0 0.0
  %498 = vmatpush1.msra.mxu0 %v472
  %499 = vmatprep.subr.mxu0 0.0
  %500 = vmatpush1.msra.mxu0 %v471
  %501 = vmatprep.subr.mxu0 0.0
  %502 = vmatpush1.msra.mxu0 %v470
  %503 = vmatprep.subr.mxu0 0.0
  %504 = vmatpush1.msra.mxu0 %v469
  %505 = vmatprep.subr.mxu0 0.0
  %506 = vmatpush1.msra.mxu0 %v468
  %507 = vmatprep.subr.mxu0 0.0
  %508 = vmatpush1.msra.mxu0 %v467
  %509 = vmatprep.subr.mxu0 0.0
  %510 = vmatpush1.msra.mxu0 %v466
  %511 = vmatprep.subr.mxu0 0.0
  %512 = vmatpush1.msra.mxu0 %v465
  %513 = vmatprep.subr.mxu0 0.0
  %514 = vmatpush2.msra.mxu0 0.0
  %515 = vmatprep.subr.mxu0 0.0
  %516 = vmatpush2.msra.mxu0 0.0
  %517 = vmatprep.subr.mxu0 0.0
  %518 = vmatpush2.msra.mxu0 0.0
  %519 = vmatprep.subr.mxu0 0.0
  %520 = vmatpush2.msra.mxu0 0.0
  %521 = vmatprep.subr.mxu0 0.0
  %522 = vmatpush2.msra.mxu0 0.0
  %523 = vmatprep.subr.mxu0 0.0
  %524 = vmatpush2.msra.mxu0 0.0
  %525 = vmatprep.subr.mxu0 0.0
  %526 = vmatpush2.msra.mxu0 0.0
  %527 = vmatprep.subr.mxu0 0.0
  %528 = vmatpush2.msra.mxu0 0.0
  %529 = vmatprep.subr.mxu0 0.0
  %530 = vmatpush2.msra.mxu0 0.0
  %531 = vmatprep.subr.mxu0 0.0
  %532 = vmatpush2.msra.mxu0 0.0
  %533 = vmatprep.subr.mxu0 0.0
  %534 = vmatpush2.msra.mxu0 0.0
  %535 = vmatprep.subr.mxu0 0.0
  %536 = vmatpush2.msra.mxu0 0.0
  %537 = vmatprep.subr.mxu0 0.0
  %538 = vmatpush2.msra.mxu0 0.0
  %539 = vmatprep.subr.mxu0 0.0
  %540 = vmatpush2.msra.mxu0 0.0
  %541 = vmatprep.subr.mxu0 0.0
  %542 = vmatpush2.msra.mxu0 0.0
  %543 = vmatprep.subr.mxu0 0.0
  %544 = vmatpush2.msra.mxu0 0.0
  %545 = vmatprep.mubr.f32.mxu0 0.0
  %546 = vmatmul.mubr.f32.gmra.mxu0 %v444
  %v547 = vpop.f32.mrf.mxu0
  %v548 = vadd.f32 0.0, %v547
  %v549 = vpop.f32.mrf.mxu0
  %550 = vdwg.mxu0
  %551 = vmatprep.subr.mxu0 0.0
  %552 = vmatpush1.msra.mxu0 %v464
  %553 = vmatprep.subr.mxu0 0.0
  %554 = vmatpush1.msra.mxu0 %v463
  %555 = vmatprep.subr.mxu0 0.0
  %556 = vmatpush1.msra.mxu0 %v462
  %557 = vmatprep.subr.mxu0 0.0
  %558 = vmatpush1.msra.mxu0 %v461
  %559 = vmatprep.subr.mxu0 0.0
  %560 = vmatpush1.msra.mxu0 %v460
  %561 = vmatprep.subr.mxu0 0.0
  %562 = vmatpush1.msra.mxu0 %v459
  %563 = vmatprep.subr.mxu0 0.0
  %564 = vmatpush1.msra.mxu0 %v458
  %565 = vmatprep.subr.mxu0 0.0
  %566 = vmatpush1.msra.mxu0 %v457
  %567 = vmatprep.subr.mxu0 0.0
  %568 = vmatpush1.msra.mxu0 %v456
  %569 = vmatprep.subr.mxu0 0.0
  %570 = vmatpush1.msra.mxu0 %v455
  %571 = vmatprep.subr.mxu0 0.0
  %572 = vmatpush1.msra.mxu0 %v454
  %573 = vmatprep.subr.mxu0 0.0
  %574 = vmatpush1.msra.mxu0 %v453
  %575 = vmatprep.subr.mxu0 0.0
  %576 = vmatpush1.msra.mxu0 %v452
  %577 = vmatprep.subr.mxu0 0.0
  %578 = vmatpush1.msra.mxu0 %v451
  %579 = vmatprep.subr.mxu0 0.0
  %580 = vmatpush1.msra.mxu0 %v450
  %581 = vmatprep.subr.mxu0 0.0
  %582 = vmatpush1.msra.mxu0 %v449
  %583 = vmatprep.subr.mxu0 0.0
  %584 = vmatpush2.msra.mxu0 0.0
  %585 = vmatprep.subr.mxu0 0.0
  %586 = vmatpush2.msra.mxu0 0.0
  %587 = vmatprep.subr.mxu0 0.0
  %588 = vmatpush2.msra.mxu0 0.0
  %589 = vmatprep.subr.mxu0 0.0
  %590 = vmatpush2.msra.mxu0 0.0
  %591 = vmatprep.subr.mxu0 0.0
  %592 = vmatpush2.msra.mxu0 0.0
  %593 = vmatprep.subr.mxu0 0.0
  %594 = vmatpush2.msra.mxu0 0.0
  %595 = vmatprep.subr.mxu0 0.0
  %596 = vmatpush2.msra.mxu0 0.0
  %597 = vmatprep.subr.mxu0 0.0
  %598 = vmatpush2.msra.mxu0 0.0
  %599 = vmatprep.subr.mxu0 0.0
  %600 = vmatpush2.msra.mxu0 0.0
  %601 = vmatprep.subr.mxu0 0.0
  %602 = vmatpush2.msra.mxu0 0.0
  %603 = vmatprep.subr.mxu0 0.0
  %604 = vmatpush2.msra.mxu0 0.0
  %605 = vmatprep.subr.mxu0 0.0
  %606 = vmatpush2.msra.mxu0 0.0
  %607 = vmatprep.subr.mxu0 0.0
  %608 = vmatpush2.msra.mxu0 0.0
  %609 = vmatprep.subr.mxu0 0.0
  %610 = vmatpush2.msra.mxu0 0.0
  %611 = vmatprep.subr.mxu0 0.0
  %612 = vmatpush2.msra.mxu0 0.0
  %613 = vmatprep.subr.mxu0 0.0
  %614 = vmatpush2.msra.mxu0 0.0
  %615 = vmatprep.mubr.f32.mxu0 0.0
  %616 = vmatmul.mubr.f32.gmra.mxu0 %v442
  %v617 = vpop.f32.mrf.mxu0
  %v618 = vadd.f32 %v548, %v617
  %v619 = vpop.f32.mrf.mxu0
  %620 = vdwg.mxu0
  %v621 = vld [vmem:[%s7 + $0x100] sm:$0xff]
  %v622 = vld [vmem:[%s7 + $0x108] sm:$0xff]
  %v623 = vld [vmem:[%s7 + $0x110] sm:$0xff]
  %v624 = vld [vmem:[%s7 + $0x118] sm:$0xff]
  %v625 = vld [vmem:[%s7 + $0x120] sm:$0xff]
  %v626 = vld [vmem:[%s7 + $0x128] sm:$0xff]
  %v627 = vld [vmem:[%s7 + $0x130] sm:$0xff]
  %v628 = vld [vmem:[%s7 + $0x138] sm:$0xff]
  %v629 = vld [vmem:[%s7 + $0x140] sm:$0xff]
  %v630 = vld [vmem:[%s7 + $0x148] sm:$0xff]
  %v631 = vld [vmem:[%s7 + $0x150] sm:$0xff]
  %v632 = vld [vmem:[%s7 + $0x158] sm:$0xff]
  %v633 = vld [vmem:[%s7 + $0x160] sm:$0xff]
  %v634 = vld [vmem:[%s7 + $0x168] sm:$0xff]
  %v635 = vld [vmem:[%s7 + $0x170] sm:$0xff]
  %v636 = vld [vmem:[%s7 + $0x178] sm:$0xff]
  %637 = vmatprep.subr.mxu0 0.0
  %638 = vmatpush1.msra.mxu0 %v636
  %639 = vmatprep.subr.mxu0 0.0
  %640 = vmatpush1.msra.mxu0 %v635
  %641 = vmatprep.subr.mxu0 0.0
  %642 = vmatpush1.msra.mxu0 %v634
  %643 = vmatprep.subr.mxu0 0.0
  %644 = vmatpush1.msra.mxu0 %v633
  %645 = vmatprep.subr.mxu0 0.0
  %646 = vmatpush1.msra.mxu0 %v632
  %647 = vmatprep.subr.mxu0 0.0
  %648 = vmatpush1.msra.mxu0 %v631
  %649 = vmatprep.subr.mxu0 0.0
  %650 = vmatpush1.msra.mxu0 %v630
  %651 = vmatprep.subr.mxu0 0.0
  %652 = vmatpush1.msra.mxu0 %v629
  %653 = vmatprep.subr.mxu0 0.0
  %654 = vmatpush1.msra.mxu0 %v628
  %655 = vmatprep.subr.mxu0 0.0
  %656 = vmatpush1.msra.mxu0 %v627
  %657 = vmatprep.subr.mxu0 0.0
  %658 = vmatpush1.msra.mxu0 %v626
  %659 = vmatprep.subr.mxu0 0.0
  %660 = vmatpush1.msra.mxu0 %v625
  %661 = vmatprep.subr.mxu0 0.0
  %662 = vmatpush1.msra.mxu0 %v624
  %663 = vmatprep.subr.mxu0 0.0
  %664 = vmatpush1.msra.mxu0 %v623
  %665 = vmatprep.subr.mxu0 0.0
  %666 = vmatpush1.msra.mxu0 %v622
  %667 = vmatprep.subr.mxu0 0.0
  %668 = vmatpush1.msra.mxu0 %v621
  %669 = vmatprep.subr.mxu0 0.0
  %670 = vmatpush2.msra.mxu0 0.0
  %671 = vmatprep.subr.mxu0 0.0
  %672 = vmatpush2.msra.mxu0 0.0
  %673 = vmatprep.subr.mxu0 0.0
  %674 = vmatpush2.msra.mxu0 0.0
  %675 = vmatprep.subr.mxu0 0.0
  %676 = vmatpush2.msra.mxu0 0.0
  %677 = vmatprep.subr.mxu0 0.0
  %678 = vmatpush2.msra.mxu0 0.0
  %679 = vmatprep.subr.mxu0 0.0
  %680 = vmatpush2.msra.mxu0 0.0
  %681 = vmatprep.subr.mxu0 0.0
  %682 = vmatpush2.msra.mxu0 0.0
  %683 = vmatprep.subr.mxu0 0.0
  %684 = vmatpush2.msra.mxu0 0.0
  %685 = vmatprep.subr.mxu0 0.0
  %686 = vmatpush2.msra.mxu0 0.0
  %687 = vmatprep.subr.mxu0 0.0
  %688 = vmatpush2.msra.mxu0 0.0
  %689 = vmatprep.subr.mxu0 0.0
  %690 = vmatpush2.msra.mxu0 0.0
  %691 = vmatprep.subr.mxu0 0.0
  %692 = vmatpush2.msra.mxu0 0.0
  %693 = vmatprep.subr.mxu0 0.0
  %694 = vmatpush2.msra.mxu0 0.0
  %695 = vmatprep.subr.mxu0 0.0
  %696 = vmatpush2.msra.mxu0 0.0
  %697 = vmatprep.subr.mxu0 0.0
  %698 = vmatpush2.msra.mxu0 0.0
  %699 = vmatprep.subr.mxu0 0.0
  %700 = vmatpush2.msra.mxu0 0.0
  %701 = vmatprep.mubr.f32.mxu0 0.0
  %702 = vmatmul.mubr.f32.gmra.mxu0 %v446
  %v703 = vpop.f32.mrf.mxu0
  %v704 = vadd.f32 0.0, %v703
  %v705 = vpop.f32.mrf.mxu0
  %706 = vdwg.mxu0
  %v707 = vadd.f32 %v618, %v704
  %v708 = vld [vmem:[%s7 + $0x180] sm:$0xff]
  %v709 = vld [vmem:[%s7 + $0x188] sm:$0xff]
  %v710 = vld [vmem:[%s7 + $0x190] sm:$0xff]
  %v711 = vld [vmem:[%s7 + $0x198] sm:$0xff]
  %v712 = vld [vmem:[%s7 + $0x1a0] sm:$0xff]
  %v713 = vld [vmem:[%s7 + $0x1a8] sm:$0xff]
  %v714 = vld [vmem:[%s7 + $0x1b0] sm:$0xff]
  %v715 = vld [vmem:[%s7 + $0x1b8] sm:$0xff]
  %v716 = vld [vmem:[%s7 + $0x1c0] sm:$0xff]
  %v717 = vld [vmem:[%s7 + $0x1c8] sm:$0xff]
  %v718 = vld [vmem:[%s7 + $0x1d0] sm:$0xff]
  %v719 = vld [vmem:[%s7 + $0x1d8] sm:$0xff]
  %v720 = vld [vmem:[%s7 + $0x1e0] sm:$0xff]
  %v721 = vld [vmem:[%s7 + $0x1e8] sm:$0xff]
  %v722 = vld [vmem:[%s7 + $0x1f0] sm:$0xff]
  %v723 = vld [vmem:[%s7 + $0x1f8] sm:$0xff]
  %724 = vmatprep.subr.mxu0 0.0
  %725 = vmatpush1.msra.mxu0 %v723
  %726 = vmatprep.subr.mxu0 0.0
  %727 = vmatpush1.msra.mxu0 %v722
  %728 = vmatprep.subr.mxu0 0.0
  %729 = vmatpush1.msra.mxu0 %v721
  %730 = vmatprep.subr.mxu0 0.0
  %731 = vmatpush1.msra.mxu0 %v720
  %732 = vmatprep.subr.mxu0 0.0
  %733 = vmatpush1.msra.mxu0 %v719
  %734 = vmatprep.subr.mxu0 0.0
  %735 = vmatpush1.msra.mxu0 %v718
  %736 = vmatprep.subr.mxu0 0.0
  %737 = vmatpush1.msra.mxu0 %v717
  %738 = vmatprep.subr.mxu0 0.0
  %739 = vmatpush1.msra.mxu0 %v716
  %740 = vmatprep.subr.mxu0 0.0
  %741 = vmatpush1.msra.mxu0 %v715
  %742 = vmatprep.subr.mxu0 0.0
  %743 = vmatpush1.msra.mxu0 %v714
  %744 = vmatprep.subr.mxu0 0.0
  %745 = vmatpush1.msra.mxu0 %v713
  %746 = vmatprep.subr.mxu0 0.0
  %747 = vmatpush1.msra.mxu0 %v712
  %748 = vmatprep.subr.mxu0 0.0
  %749 = vmatpush1.msra.mxu0 %v711
  %750 = vmatprep.subr.mxu0 0.0
  %751 = vmatpush1.msra.mxu0 %v710
  %752 = vmatprep.subr.mxu0 0.0
  %753 = vmatpush1.msra.mxu0 %v709
  %754 = vmatprep.subr.mxu0 0.0
  %755 = vmatpush1.msra.mxu0 %v708
  %756 = vmatprep.subr.mxu0 0.0
  %757 = vmatpush2.msra.mxu0 0.0
  %758 = vmatprep.subr.mxu0 0.0
  %759 = vmatpush2.msra.mxu0 0.0
  %760 = vmatprep.subr.mxu0 0.0
  %761 = vmatpush2.msra.mxu0 0.0
  %762 = vmatprep.subr.mxu0 0.0
  %763 = vmatpush2.msra.mxu0 0.0
  %764 = vmatprep.subr.mxu0 0.0
  %765 = vmatpush2.msra.mxu0 0.0
  %766 = vmatprep.subr.mxu0 0.0
  %767 = vmatpush2.msra.mxu0 0.0
  %768 = vmatprep.subr.mxu0 0.0
  %769 = vmatpush2.msra.mxu0 0.0
  %770 = vmatprep.subr.mxu0 0.0
  %771 = vmatpush2.msra.mxu0 0.0
  %772 = vmatprep.subr.mxu0 0.0
  %773 = vmatpush2.msra.mxu0 0.0
  %774 = vmatprep.subr.mxu0 0.0
  %775 = vmatpush2.msra.mxu0 0.0
  %776 = vmatprep.subr.mxu0 0.0
  %777 = vmatpush2.msra.mxu0 0.0
  %778 = vmatprep.subr.mxu0 0.0
  %779 = vmatpush2.msra.mxu0 0.0
  %780 = vmatprep.subr.mxu0 0.0
  %781 = vmatpush2.msra.mxu0 0.0
  %782 = vmatprep.subr.mxu0 0.0
  %783 = vmatpush2.msra.mxu0 0.0
  %784 = vmatprep.subr.mxu0 0.0
  %785 = vmatpush2.msra.mxu0 0.0
  %786 = vmatprep.subr.mxu0 0.0
  %787 = vmatpush2.msra.mxu0 0.0
  %788 = vmatprep.mubr.f32.mxu0 0.0
  %789 = vmatmul.mubr.f32.gmra.mxu0 %v448
  %v790 = vpop.f32.mrf.mxu0
  %v791 = vadd.f32 0.0, %v790
  %v792 = vpop.f32.mrf.mxu0
  %793 = vdwg.mxu0
  %v794 = vadd.f32 %v707, %v791
  %v795 = vld [vmem:[%s8] sm:$0x1]
  %v797 = vlaneseq
  %v798 = vshrl.u32 %v797, 7
  %v799 = vsub.s32 0, %v798
  %v800 = vrot.slane %v795, %v799
  %v802 = vadd.f32 %v794, %v800
  %v803 = vxor.u32 %v802, 2147483648
  %v804 = vmul.f32 %v803, 1.442695
  %v805 = vpow.pop %v804
  %v806 = vadd.f32 %v805, 1.0
  %v807 = vrcp.pop %v806
  %v808 = vmul.f32 1.0, %v807
  %v809 = vld [vmem:[%s9] sm:$0xff]
  %v810 = vld [vmem:[%s9 + $0x8] sm:$0xff]
  %v811 = vld [vmem:[%s9 + $0x10] sm:$0xff]
  %v812 = vld [vmem:[%s9 + $0x18] sm:$0xff]
  %v813 = vld [vmem:[%s9 + $0x20] sm:$0xff]
  %v814 = vld [vmem:[%s9 + $0x28] sm:$0xff]
  %v815 = vld [vmem:[%s9 + $0x30] sm:$0xff]
  %v816 = vld [vmem:[%s9 + $0x38] sm:$0xff]
  %v817 = vld [vmem:[%s9 + $0x40] sm:$0xff]
  %v818 = vld [vmem:[%s9 + $0x48] sm:$0xff]
  %v819 = vld [vmem:[%s9 + $0x50] sm:$0xff]
  %v820 = vld [vmem:[%s9 + $0x58] sm:$0xff]
  %v821 = vld [vmem:[%s9 + $0x60] sm:$0xff]
  %v822 = vld [vmem:[%s9 + $0x68] sm:$0xff]
  %v823 = vld [vmem:[%s9 + $0x70] sm:$0xff]
  %v824 = vld [vmem:[%s9 + $0x78] sm:$0xff]
  %v825 = vld [vmem:[%s10] sm:$0x1]
  %v827 = vlaneseq
  %v828 = vshrl.u32 %v827, 7
  %v829 = vsub.s32 0, %v828
  %v830 = vrot.slane %v825, %v829
  %832 = vmatprep.subr.mxu0 0.0
  %833 = vmatpush1.msra.mxu0 %v824
  %834 = vmatprep.subr.mxu0 0.0
  %835 = vmatpush1.msra.mxu0 %v823
  %836 = vmatprep.subr.mxu0 0.0
  %837 = vmatpush1.msra.mxu0 %v822
  %838 = vmatprep.subr.mxu0 0.0
  %839 = vmatpush1.msra.mxu0 %v821
  %840 = vmatprep.subr.mxu0 0.0
  %841 = vmatpush1.msra.mxu0 %v820
  %842 = vmatprep.subr.mxu0 0.0
  %843 = vmatpush1.msra.mxu0 %v819
  %844 = vmatprep.subr.mxu0 0.0
  %845 = vmatpush1.msra.mxu0 %v818
  %846 = vmatprep.subr.mxu0 0.0
  %847 = vmatpush1.msra.mxu0 %v817
  %848 = vmatprep.subr.mxu0 0.0
  %849 = vmatpush1.msra.mxu0 %v816
  %850 = vmatprep.subr.mxu0 0.0
  %851 = vmatpush1.msra.mxu0 %v815
  %852 = vmatprep.subr.mxu0 0.0
  %853 = vmatpush1.msra.mxu0 %v814
  %854 = vmatprep.subr.mxu0 0.0
  %855 = vmatpush1.msra.mxu0 %v813
  %856 = vmatprep.subr.mxu0 0.0
  %857 = vmatpush1.msra.mxu0 %v812
  %858 = vmatprep.subr.mxu0 0.0
  %859 = vmatpush1.msra.mxu0 %v811
  %860 = vmatprep.subr.mxu0 0.0
  %861 = vmatpush1.msra.mxu0 %v810
  %862 = vmatprep.subr.mxu0 0.0
  %863 = vmatpush1.msra.mxu0 %v809
  %864 = vmatprep.subr.mxu0 0.0
  %865 = vmatpush2.msra.mxu0 0.0
  %866 = vmatprep.subr.mxu0 0.0
  %867 = vmatpush2.msra.mxu0 0.0
  %868 = vmatprep.subr.mxu0 0.0
  %869 = vmatpush2.msra.mxu0 0.0
  %870 = vmatprep.subr.mxu0 0.0
  %871 = vmatpush2.msra.mxu0 0.0
  %872 = vmatprep.subr.mxu0 0.0
  %873 = vmatpush2.msra.mxu0 0.0
  %874 = vmatprep.subr.mxu0 0.0
  %875 = vmatpush2.msra.mxu0 0.0
  %876 = vmatprep.subr.mxu0 0.0
  %877 = vmatpush2.msra.mxu0 0.0
  %878 = vmatprep.subr.mxu0 0.0
  %879 = vmatpush2.msra.mxu0 0.0
  %880 = vmatprep.subr.mxu0 0.0
  %881 = vmatpush2.msra.mxu0 0.0
  %882 = vmatprep.subr.mxu0 0.0
  %883 = vmatpush2.msra.mxu0 0.0
  %884 = vmatprep.subr.mxu0 0.0
  %885 = vmatpush2.msra.mxu0 0.0
  %886 = vmatprep.subr.mxu0 0.0
  %887 = vmatpush2.msra.mxu0 0.0
  %888 = vmatprep.subr.mxu0 0.0
  %889 = vmatpush2.msra.mxu0 0.0
  %890 = vmatprep.subr.mxu0 0.0
  %891 = vmatpush2.msra.mxu0 0.0
  %892 = vmatprep.subr.mxu0 0.0
  %893 = vmatpush2.msra.mxu0 0.0
  %894 = vmatprep.subr.mxu0 0.0
  %895 = vmatpush2.msra.mxu0 0.0
  %896 = vmatprep.mubr.f32.mxu0 0.0
  %897 = vmatmul.mubr.f32.gmra.mxu0 %v808
  %v898 = vpop.f32.mrf.mxu0
  %v899 = vadd.f32 %v830, %v898
  %v900 = vpop.f32.mrf.mxu0
  %901 = vdwg.mxu0
  %v902 = vxor.u32 %v899, 2147483648
  %v903 = vmul.f32 %v902, 1.442695
  %v904 = vpow.pop %v903
  %v905 = vadd.f32 %v904, 1.0
  %v906 = vrcp.pop %v905
  %v907 = vmul.f32 1.0, %v906
  %v908 = vld [vmem:[%s11] sm:$0xff]
  %v909 = vld [vmem:[%s11 + $0x8] sm:$0xff]
  %v910 = vld [vmem:[%s11 + $0x10] sm:$0xff]
  %v911 = vld [vmem:[%s11 + $0x18] sm:$0xff]
  %v912 = vld [vmem:[%s11 + $0x20] sm:$0xff]
  %v913 = vld [vmem:[%s11 + $0x28] sm:$0xff]
  %v914 = vld [vmem:[%s11 + $0x30] sm:$0xff]
  %v915 = vld [vmem:[%s11 + $0x38] sm:$0xff]
  %v916 = vld [vmem:[%s11 + $0x40] sm:$0xff]
  %v917 = vld [vmem:[%s11 + $0x48] sm:$0xff]
  %v918 = vld [vmem:[%s11 + $0x50] sm:$0xff]
  %v919 = vld [vmem:[%s11 + $0x58] sm:$0xff]
  %v920 = vld [vmem:[%s11 + $0x60] sm:$0xff]
  %v921 = vld [vmem:[%s11 + $0x68] sm:$0xff]
  %v922 = vld [vmem:[%s11 + $0x70] sm:$0xff]
  %v923 = vld [vmem:[%s11 + $0x78] sm:$0xff]
  %v924 = vld [vmem:[%s12] sm:$0x1]
  %v926 = vlaneseq
  %v927 = vshrl.u32 %v926, 7
  %v928 = vsub.s32 0, %v927
  %v929 = vrot.slane %v924, %v928
  %931 = vmatprep.subr.mxu0 0.0
  %932 = vmatpush1.msra.mxu0 %v923
  %933 = vmatprep.subr.mxu0 0.0
  %934 = vmatpush1.msra.mxu0 %v922
  %935 = vmatprep.subr.mxu0 0.0
  %936 = vmatpush1.msra.mxu0 %v921
  %937 = vmatprep.subr.mxu0 0.0
  %938 = vmatpush1.msra.mxu0 %v920
  %939 = vmatprep.subr.mxu0 0.0
  %940 = vmatpush1.msra.mxu0 %v919
  %941 = vmatprep.subr.mxu0 0.0
  %942 = vmatpush1.msra.mxu0 %v918
  %943 = vmatprep.subr.mxu0 0.0
  %944 = vmatpush1.msra.mxu0 %v917
  %945 = vmatprep.subr.mxu0 0.0
  %946 = vmatpush1.msra.mxu0 %v916
  %947 = vmatprep.subr.mxu0 0.0
  %948 = vmatpush1.msra.mxu0 %v915
  %949 = vmatprep.subr.mxu0 0.0
  %950 = vmatpush1.msra.mxu0 %v914
  %951 = vmatprep.subr.mxu0 0.0
  %952 = vmatpush1.msra.mxu0 %v913
  %953 = vmatprep.subr.mxu0 0.0
  %954 = vmatpush1.msra.mxu0 %v912
  %955 = vmatprep.subr.mxu0 0.0
  %956 = vmatpush1.msra.mxu0 %v911
  %957 = vmatprep.subr.mxu0 0.0
  %958 = vmatpush1.msra.mxu0 %v910
  %959 = vmatprep.subr.mxu0 0.0
  %960 = vmatpush1.msra.mxu0 %v909
  %961 = vmatprep.subr.mxu0 0.0
  %962 = vmatpush1.msra.mxu0 %v908
  %963 = vmatprep.subr.mxu0 0.0
  %964 = vmatpush2.msra.mxu0 0.0
  %965 = vmatprep.subr.mxu0 0.0
  %966 = vmatpush2.msra.mxu0 0.0
  %967 = vmatprep.subr.mxu0 0.0
  %968 = vmatpush2.msra.mxu0 0.0
  %969 = vmatprep.subr.mxu0 0.0
  %970 = vmatpush2.msra.mxu0 0.0
  %971 = vmatprep.subr.mxu0 0.0
  %972 = vmatpush2.msra.mxu0 0.0
  %973 = vmatprep.subr.mxu0 0.0
  %974 = vmatpush2.msra.mxu0 0.0
  %975 = vmatprep.subr.mxu0 0.0
  %976 = vmatpush2.msra.mxu0 0.0
  %977 = vmatprep.subr.mxu0 0.0
  %978 = vmatpush2.msra.mxu0 0.0
  %979 = vmatprep.subr.mxu0 0.0
  %980 = vmatpush2.msra.mxu0 0.0
  %981 = vmatprep.subr.mxu0 0.0
  %982 = vmatpush2.msra.mxu0 0.0
  %983 = vmatprep.subr.mxu0 0.0
  %984 = vmatpush2.msra.mxu0 0.0
  %985 = vmatprep.subr.mxu0 0.0
  %986 = vmatpush2.msra.mxu0 0.0
  %987 = vmatprep.subr.mxu0 0.0
  %988 = vmatpush2.msra.mxu0 0.0
  %989 = vmatprep.subr.mxu0 0.0
  %990 = vmatpush2.msra.mxu0 0.0
  %991 = vmatprep.subr.mxu0 0.0
  %992 = vmatpush2.msra.mxu0 0.0
  %993 = vmatprep.subr.mxu0 0.0
  %994 = vmatpush2.msra.mxu0 0.0
  %995 = vmatprep.mubr.f32.mxu0 0.0
  %996 = vmatmul.mubr.f32.gmra.mxu0 %v907
  %v997 = vpop.f32.mrf.mxu0
  %v998 = vadd.f32 %v929, %v997
  %v999 = vpop.f32.mrf.mxu0
  %1000 = vdwg.mxu0
  %1001 = vst [vmem:[%s13] sm:$0xff] %v998
  // Predicated region
  $region54: #{_forward_impl.1} parent=0 // pred_check
    _
  $region55: #{_forward_impl.1} parent=0 // pred_check_branch
    %1003 = sbr.rel (0) target = $region57
  $region56: #{_forward_impl.1} parent=0 // pred_region
    _
  $region57: #{_forward_impl.1} parent=0 // pred_fallthru
    _
  // Predicated region
  $region58: #{_forward_impl.1} parent=0 // pred_check
    _
  $region59: #{_forward_impl.1} parent=0 // pred_check_branch
    %1005 = sbr.rel (0) target = $region61
  $region60: #{_forward_impl.1} parent=0 // pred_region
    _
  $region61: #{_forward_impl.1} parent=0 // pred_fallthru
    _

// kernel: _forward_impl.1
$region0: #{_forward_impl.1}
  #allocation0 [shape = 'u32[]', space=smem, size = 0x4, offset = 0x4, fixed_abs, tag = 'smem constant byte address 0x4 - core index']
  #allocation1 [shape = 'u32[144,128]{1,0:T(1,128)}', space=vmem, size = 0x12000, scoped, tag = 'internal scratch']
  %s0 = inlined_call_operand.vmem [shape: f32[32,64], index: 0, kind: input, shape index: {}]
  %s1 = inlined_call_operand.vmem [shape: f32[64,128], index: 1, kind: input, shape index: {}]
  %s2 = inlined_call_operand.vmem [shape: f32[1,128], index: 2, kind: input, shape index: {}]
  %s3 = inlined_call_operand.vmem [shape: f32[128,128], index: 3, kind: input, shape index: {}]
  %s4 = inlined_call_operand.vmem [shape: f32[1,128], index: 4, kind: input, shape index: {}]
  %s5 = inlined_call_operand.vmem [shape: f32[128,128], index: 5, kind: input, shape index: {}]
  %s6 = inlined_call_operand.vmem [shape: f32[1,128], index: 6, kind: input, shape index: {}]
  %s7 = inlined_call_operand.vmem [shape: f32[512,128], index: 7, kind: input, shape index: {}]
  %s8 = inlined_call_operand.vmem [shape: f32[1,128], index: 8, kind: input, shape index: {}]
  %s9 = inlined_call_operand.vmem [shape: f32[128,128], index: 9, kind: input, shape index: {}]
  %s10 = inlined_call_operand.vmem [shape: f32[1,128], index: 10, kind: input, shape index: {}]
  %s11 = inlined_call_operand.vmem [shape: f32[128,128], index: 11, kind: input, shape index: {}]
  %s12 = inlined_call_operand.vmem [shape: f32[1,128], index: 12, kind: input, shape index: {}]
  %s13 = inlined_call_operand.vmem [shape: f32[8,128], index: 13, kind: output, shape index: {}]
  %s14 = sld [smem:[#allocation0]]
  $region62: #{_forward_impl.1} parent=0
    _
  %s16 = ssub.s32 1, %s14
  %s17 = scalar_select 0, %s16, %s14
  // Predicated region
  $region2: #{_forward_impl.1} parent=0 // pred_check
    _
  $region3: #{_forward_impl.1} parent=0 // pred_check_branch
    %19 = sbr.rel (0) target = $region5
  $region4: #{_forward_impl.1} parent=0 // pred_region
    _
  $region5: #{_forward_impl.1} parent=0 // pred_fallthru
    _
  // Predicated region
  $region6: #{_forward_impl.1} parent=0 // pred_check
    _
  $region7: #{_forward_impl.1} parent=0 // pred_check_branch
    %21 = sbr.rel (0) target = $region9
  $region8: #{_forward_impl.1} parent=0 // pred_region
    _
  $region9: #{_forward_impl.1} parent=0 // pred_fallthru
    _
  // Predicated region
  $region10: #{_forward_impl.1} parent=0 // pred_check
    _
  $region11: #{_forward_impl.1} parent=0 // pred_check_branch
    %23 = sbr.rel (0) target = $region13
  $region12: #{_forward_impl.1} parent=0 // pred_region
    _
  $region13: #{_forward_impl.1} parent=0 // pred_fallthru
    _
  // Predicated region
  $region14: #{_forward_impl.1} parent=0 // pred_check
    _
  $region15: #{_forward_impl.1} parent=0 // pred_check_branch
    %25 = sbr.rel (0) target = $region17
  $region16: #{_forward_impl.1} parent=0 // pred_region
    _
  $region17: #{_forward_impl.1} parent=0 // pred_fallthru
    _
  // Predicated region
  $region18: #{_forward_impl.1} parent=0 // pred_check
    _
  $region19: #{_forward_impl.1} parent=0 // pred_check_branch
    %27 = sbr.rel (0) target = $region21
  $region20: #{_forward_impl.1} parent=0 // pred_region
    _
  $region21: #{_forward_impl.1} parent=0 // pred_fallthru
    _
  // Predicated region
  $region22: #{_forward_impl.1} parent=0 // pred_check
    _
  $region23: #{_forward_impl.1} parent=0 // pred_check_branch
    %29 = sbr.rel (0) target = $region25
  $region24: #{_forward_impl.1} parent=0 // pred_region
    _
  $region25: #{_forward_impl.1} parent=0 // pred_fallthru
    _
  // Predicated region
  $region26: #{_forward_impl.1} parent=0 // pred_check
    _
  $region27: #{_forward_impl.1} parent=0 // pred_check_branch
    %31 = sbr.rel (0) target = $region29
  $region28: #{_forward_impl.1} parent=0 // pred_region
    _
  $region29: #{_forward_impl.1} parent=0 // pred_fallthru
    _
  // Predicated region
  $region30: #{_forward_impl.1} parent=0 // pred_check
    _
  $region31: #{_forward_impl.1} parent=0 // pred_check_branch
    %33 = sbr.rel (0) target = $region33
  $region32: #{_forward_impl.1} parent=0 // pred_region
    _
  $region33: #{_forward_impl.1} parent=0 // pred_fallthru
    _
  // Predicated region
  $region34: #{_forward_impl.1} parent=0 // pred_check
    _
  $region35: #{_forward_impl.1} parent=0 // pred_check_branch
    %35 = sbr.rel (0) target = $region37
  $region36: #{_forward_impl.1} parent=0 // pred_region
    _
  $region37: #{_forward_impl.1} parent=0 // pred_fallthru
    _
  // Predicated region
  $region38: #{_forward_impl.1} parent=0 // pred_check
    _
  $region39: #{_forward_impl.1} parent=0 // pred_check_branch
    %37 = sbr.rel (0) target = $region41
  $region40: #{_forward_impl.1} parent=0 // pred_region
    _
  $region41: #{_forward_impl.1} parent=0 // pred_fallthru
    _
  // Predicated region
  $region42: #{_forward_impl.1} parent=0 // pred_check
    _
  $region43: #{_forward_impl.1} parent=0 // pred_check_branch
    %39 = sbr.rel (0) target = $region45
  $region44: #{_forward_impl.1} parent=0 // pred_region
    _
  $region45: #{_forward_impl.1} parent=0 // pred_fallthru
    _
  // Predicated region
  $region46: #{_forward_impl.1} parent=0 // pred_check
    _
  $region47: #{_forward_impl.1} parent=0 // pred_check_branch
    %41 = sbr.rel (0) target = $region49
  $region48: #{_forward_impl.1} parent=0 // pred_region
    _
  $region49: #{_forward_impl.1} parent=0 // pred_fallthru
    _
  // Predicated region
  $region50: #{_forward_impl.1} parent=0 // pred_check
    _
  $region51: #{_forward_impl.1} parent=0 // pred_check_branch
    %43 = sbr.rel (0) target = $region53
  $region52: #{_forward_impl.1} parent=0 // pred_region
    _
  $region53: #{_forward_impl.1} parent=0 // pred_fallthru
    _
  %v44 = vld [vmem:[%s0] sm:$0xff]
  %v45 = vld [vmem:[%s0 + $0x8] sm:$0xff]
  %v46 = vld [vmem:[%s0 + $0x10] sm:$0xff]
  %v47 = vld [vmem:[%s0 + $0x18] sm:$0xff]
  %v48 = vld [vmem:[%s1] sm:$0xff]
  %v49 = vld [vmem:[%s1 + $0x8] sm:$0xff]
  %v50 = vld [vmem:[%s1 + $0x10] sm:$0xff]
  %v51 = vld [vmem:[%s1 + $0x18] sm:$0xff]
  %v52 = vld [vmem:[%s1 + $0x20] sm:$0xff]
  %v53 = vld [vmem:[%s1 + $0x28] sm:$0xff]
  %v54 = vld [vmem:[%s1 + $0x30] sm:$0xff]
  %v55 = vld [vmem:[%s1 + $0x38] sm:$0xff]
  %v56 = vld [vmem:[%s2] sm:$0x1]
  %v58 = vlaneseq
  %v59 = vshrl.u32 %v58, 7
  %v60 = vsub.s32 0, %v59
  %v61 = vrot.slane %v56, %v60
  %vm63 = vcmask 523264
  %v65 = vsel %vm63, %v44, 0
  %v68 = vsel %vm63, %v45, 0
  %v71 = vsel %vm63, %v46, 0
  %v74 = vsel %vm63, %v47, 0
  %76 = vmatprep.subr.mxu0 0.0
  %77 = vmatpush1.msra.mxu0 0.0
  %78 = vmatprep.subr.mxu0 0.0
  %79 = vmatpush1.msra.mxu0 0.0
  %80 = vmatprep.subr.mxu0 0.0
  %81 = vmatpush1.msra.mxu0 0.0
  %82 = vmatprep.subr.mxu0 0.0
  %83 = vmatpush1.msra.mxu0 0.0
  %84 = vmatprep.subr.mxu0 0.0
  %85 = vmatpush1.msra.mxu0 0.0
  %86 = vmatprep.subr.mxu0 0.0
  %87 = vmatpush1.msra.mxu0 0.0
  %88 = vmatprep.subr.mxu0 0.0
  %89 = vmatpush1.msra.mxu0 0.0
  %90 = vmatprep.subr.mxu0 0.0
  %91 = vmatpush1.msra.mxu0 0.0
  %92 = vmatprep.subr.mxu0 0.0
  %93 = vmatpush1.msra.mxu0 %v55
  %94 = vmatprep.subr.mxu0 0.0
  %95 = vmatpush1.msra.mxu0 %v54
  %96 = vmatprep.subr.mxu0 0.0
  %97 = vmatpush1.msra.mxu0 %v53
  %98 = vmatprep.subr.mxu0 0.0
  %99 = vmatpush1.msra.mxu0 %v52
  %100 = vmatprep.subr.mxu0 0.0
  %101 = vmatpush1.msra.mxu0 %v51
  %102 = vmatprep.subr.mxu0 0.0
  %103 = vmatpush1.msra.mxu0 %v50
  %104 = vmatprep.subr.mxu0 0.0
  %105 = vmatpush1.msra.mxu0 %v49
  %106 = vmatprep.subr.mxu0 0.0
  %107 = vmatpush1.msra.mxu0 %v48
  %108 = vmatprep.subr.mxu0 0.0
  %109 = vmatpush2.msra.mxu0 0.0
  %110 = vmatprep.subr.mxu0 0.0
  %111 = vmatpush2.msra.mxu0 0.0
  %112 = vmatprep.subr.mxu0 0.0
  %113 = vmatpush2.msra.mxu0 0.0
  %114 = vmatprep.subr.mxu0 0.0
  %115 = vmatpush2.msra.mxu0 0.0
  %116 = vmatprep.subr.mxu0 0.0
  %117 = vmatpush2.msra.mxu0 0.0
  %118 = vmatprep.subr.mxu0 0.0
  %119 = vmatpush2.msra.mxu0 0.0
  %120 = vmatprep.subr.mxu0 0.0
  %121 = vmatpush2.msra.mxu0 0.0
  %122 = vmatprep.subr.mxu0 0.0
  %123 = vmatpush2.msra.mxu0 0.0
  %124 = vmatprep.subr.mxu0 0.0
  %125 = vmatpush2.msra.mxu0 0.0
  %126 = vmatprep.subr.mxu0 0.0
  %127 = vmatpush2.msra.mxu0 0.0
  %128 = vmatprep.subr.mxu0 0.0
  %129 = vmatpush2.msra.mxu0 0.0
  %130 = vmatprep.subr.mxu0 0.0
  %131 = vmatpush2.msra.mxu0 0.0
  %132 = vmatprep.subr.mxu0 0.0
  %133 = vmatpush2.msra.mxu0 0.0
  %134 = vmatprep.subr.mxu0 0.0
  %135 = vmatpush2.msra.mxu0 0.0
  %136 = vmatprep.subr.mxu0 0.0
  %137 = vmatpush2.msra.mxu0 0.0
  %138 = vmatprep.subr.mxu0 0.0
  %139 = vmatpush2.msra.mxu0 0.0
  %140 = vmatprep.mubr.f32.mxu0 0.0
  %141 = vmatmul.mubr.f32.gmra.mxu0 %v65
  %v142 = vpop.f32.mrf.mxu0
  %v143 = vadd.f32 %v61, %v142
  %v144 = vpop.f32.mrf.mxu0
  %145 = vmatprep.mubr.f32.mxu0 0.0
  %146 = vmatmul.mubr.f32.gmra.mxu0 %v68
  %v147 = vpop.f32.mrf.mxu0
  %v148 = vadd.f32 %v61, %v147
  %v149 = vpop.f32.mrf.mxu0
  %150 = vmatprep.mubr.f32.mxu0 0.0
  %151 = vmatmul.mubr.f32.gmra.mxu0 %v71
  %v152 = vpop.f32.mrf.mxu0
  %v153 = vadd.f32 %v61, %v152
  %v154 = vpop.f32.mrf.mxu0
  %155 = vmatprep.mubr.f32.mxu0 0.0
  %156 = vmatmul.mubr.f32.gmra.mxu0 %v74
  %v157 = vpop.f32.mrf.mxu0
  %v158 = vadd.f32 %v61, %v157
  %v159 = vpop.f32.mrf.mxu0
  %160 = vdwg.mxu0
  %v161 = vxor.u32 %v143, 2147483648
  %v162 = vxor.u32 %v148, 2147483648
  %v163 = vxor.u32 %v153, 2147483648
  %v164 = vxor.u32 %v158, 2147483648
  %v165 = vmul.f32 %v161, 1.442695
  %v166 = vpow.pop %v165
  %v167 = vmul.f32 %v162, 1.442695
  %v168 = vpow.pop %v167
  %v169 = vmul.f32 %v163, 1.442695
  %v170 = vpow.pop %v169
  %v171 = vmul.f32 %v164, 1.442695
  %v172 = vpow.pop %v171
  %v173 = vadd.f32 %v166, 1.0
  %v174 = vadd.f32 %v168, 1.0
  %v175 = vadd.f32 %v170, 1.0
  %v176 = vadd.f32 %v172, 1.0
  %v177 = vrcp.pop %v173
  %v178 = vmul.f32 1.0, %v177
  %v179 = vrcp.pop %v174
  %v180 = vmul.f32 1.0, %v179
  %v181 = vrcp.pop %v175
  %v182 = vmul.f32 1.0, %v181
  %v183 = vrcp.pop %v176
  %v184 = vmul.f32 1.0, %v183
  %v185 = vld [vmem:[%s3] sm:$0xff]
  %v186 = vld [vmem:[%s3 + $0x8] sm:$0xff]
  %v187 = vld [vmem:[%s3 + $0x10] sm:$0xff]
  %v188 = vld [vmem:[%s3 + $0x18] sm:$0xff]
  %v189 = vld [vmem:[%s3 + $0x20] sm:$0xff]
  %v190 = vld [vmem:[%s3 + $0x28] sm:$0xff]
  %v191 = vld [vmem:[%s3 + $0x30] sm:$0xff]
  %v192 = vld [vmem:[%s3 + $0x38] sm:$0xff]
  %v193 = vld [vmem:[%s3 + $0x40] sm:$0xff]
  %v194 = vld [vmem:[%s3 + $0x48] sm:$0xff]
  %v195 = vld [vmem:[%s3 + $0x50] sm:$0xff]
  %v196 = vld [vmem:[%s3 + $0x58] sm:$0xff]
  %v197 = vld [vmem:[%s3 + $0x60] sm:$0xff]
  %v198 = vld [vmem:[%s3 + $0x68] sm:$0xff]
  %v199 = vld [vmem:[%s3 + $0x70] sm:$0xff]
  %v200 = vld [vmem:[%s3 + $0x78] sm:$0xff]
  %v201 = vld [vmem:[%s4] sm:$0x1]
  %v203 = vlaneseq
  %v204 = vshrl.u32 %v203, 7
  %v205 = vsub.s32 0, %v204
  %v206 = vrot.slane %v201, %v205
  %208 = vmatprep.subr.mxu0 0.0
  %209 = vmatpush1.msra.mxu0 %v200
  %210 = vmatprep.subr.mxu0 0.0
  %211 = vmatpush1.msra.mxu0 %v199
  %212 = vmatprep.subr.mxu0 0.0
  %213 = vmatpush1.msra.mxu0 %v198
  %214 = vmatprep.subr.mxu0 0.0
  %215 = vmatpush1.msra.mxu0 %v197
  %216 = vmatprep.subr.mxu0 0.0
  %217 = vmatpush1.msra.mxu0 %v196
  %218 = vmatprep.subr.mxu0 0.0
  %219 = vmatpush1.msra.mxu0 %v195
  %220 = vmatprep.subr.mxu0 0.0
  %221 = vmatpush1.msra.mxu0 %v194
  %222 = vmatprep.subr.mxu0 0.0
  %223 = vmatpush1.msra.mxu0 %v193
  %224 = vmatprep.subr.mxu0 0.0
  %225 = vmatpush1.msra.mxu0 %v192
  %226 = vmatprep.subr.mxu0 0.0
  %227 = vmatpush1.msra.mxu0 %v191
  %228 = vmatprep.subr.mxu0 0.0
  %229 = vmatpush1.msra.mxu0 %v190
  %230 = vmatprep.subr.mxu0 0.0
  %231 = vmatpush1.msra.mxu0 %v189
  %232 = vmatprep.subr.mxu0 0.0
  %233 = vmatpush1.msra.mxu0 %v188
  %234 = vmatprep.subr.mxu0 0.0
  %235 = vmatpush1.msra.mxu0 %v187
  %236 = vmatprep.subr.mxu0 0.0
  %237 = vmatpush1.msra.mxu0 %v186
  %238 = vmatprep.subr.mxu0 0.0
  %239 = vmatpush1.msra.mxu0 %v185
  %240 = vmatprep.subr.mxu0 0.0
  %241 = vmatpush2.msra.mxu0 0.0
  %242 = vmatprep.subr.mxu0 0.0
  %243 = vmatpush2.msra.mxu0 0.0
  %244 = vmatprep.subr.mxu0 0.0
  %245 = vmatpush2.msra.mxu0 0.0
  %246 = vmatprep.subr.mxu0 0.0
  %247 = vmatpush2.msra.mxu0 0.0
  %248 = vmatprep.subr.mxu0 0.0
  %249 = vmatpush2.msra.mxu0 0.0
  %250 = vmatprep.subr.mxu0 0.0
  %251 = vmatpush2.msra.mxu0 0.0
  %252 = vmatprep.subr.mxu0 0.0
  %253 = vmatpush2.msra.mxu0 0.0
  %254 = vmatprep.subr.mxu0 0.0
  %255 = vmatpush2.msra.mxu0 0.0
  %256 = vmatprep.subr.mxu0 0.0
  %257 = vmatpush2.msra.mxu0 0.0
  %258 = vmatprep.subr.mxu0 0.0
  %259 = vmatpush2.msra.mxu0 0.0
  %260 = vmatprep.subr.mxu0 0.0
  %261 = vmatpush2.msra.mxu0 0.0
  %262 = vmatprep.subr.mxu0 0.0
  %263 = vmatpush2.msra.mxu0 0.0
  %264 = vmatprep.subr.mxu0 0.0
  %265 = vmatpush2.msra.mxu0 0.0
  %266 = vmatprep.subr.mxu0 0.0
  %267 = vmatpush2.msra.mxu0 0.0
  %268 = vmatprep.subr.mxu0 0.0
  %269 = vmatpush2.msra.mxu0 0.0
  %270 = vmatprep.subr.mxu0 0.0
  %271 = vmatpush2.msra.mxu0 0.0
  %272 = vmatprep.mubr.f32.mxu0 0.0
  %273 = vmatmul.mubr.f32.gmra.mxu0 %v178
  %v274 = vpop.f32.mrf.mxu0
  %v275 = vadd.f32 %v206, %v274
  %v276 = vpop.f32.mrf.mxu0
  %277 = vmatprep.mubr.f32.mxu0 0.0
  %278 = vmatmul.mubr.f32.gmra.mxu0 %v180
  %v279 = vpop.f32.mrf.mxu0
  %v280 = vadd.f32 %v206, %v279
  %v281 = vpop.f32.mrf.mxu0
  %282 = vmatprep.mubr.f32.mxu0 0.0
  %283 = vmatmul.mubr.f32.gmra.mxu0 %v182
  %v284 = vpop.f32.mrf.mxu0
  %v285 = vadd.f32 %v206, %v284
  %v286 = vpop.f32.mrf.mxu0
  %287 = vmatprep.mubr.f32.mxu0 0.0
  %288 = vmatmul.mubr.f32.gmra.mxu0 %v184
  %v289 = vpop.f32.mrf.mxu0
  %v290 = vadd.f32 %v206, %v289
  %v291 = vpop.f32.mrf.mxu0
  %292 = vdwg.mxu0
  %v293 = vxor.u32 %v275, 2147483648
  %v294 = vxor.u32 %v280, 2147483648
  %v295 = vxor.u32 %v285, 2147483648
  %v296 = vxor.u32 %v290, 2147483648
  %v297 = vmul.f32 %v293, 1.442695
  %v298 = vpow.pop %v297
  %v299 = vmul.f32 %v294, 1.442695
  %v300 = vpow.pop %v299
  %v301 = vmul.f32 %v295, 1.442695
  %v302 = vpow.pop %v301
  %v303 = vmul.f32 %v296, 1.442695
  %v304 = vpow.pop %v303
  %v305 = vadd.f32 %v298, 1.0
  %v306 = vadd.f32 %v300, 1.0
  %v307 = vadd.f32 %v302, 1.0
  %v308 = vadd.f32 %v304, 1.0
  %v309 = vrcp.pop %v305
  %v310 = vmul.f32 1.0, %v309
  %v311 = vrcp.pop %v306
  %v312 = vmul.f32 1.0, %v311
  %v313 = vrcp.pop %v307
  %v314 = vmul.f32 1.0, %v313
  %v315 = vrcp.pop %v308
  %v316 = vmul.f32 1.0, %v315
  %v317 = vld [vmem:[%s5] sm:$0xff]
  %v318 = vld [vmem:[%s5 + $0x8] sm:$0xff]
  %v319 = vld [vmem:[%s5 + $0x10] sm:$0xff]
  %v320 = vld [vmem:[%s5 + $0x18] sm:$0xff]
  %v321 = vld [vmem:[%s5 + $0x20] sm:$0xff]
  %v322 = vld [vmem:[%s5 + $0x28] sm:$0xff]
  %v323 = vld [vmem:[%s5 + $0x30] sm:$0xff]
  %v324 = vld [vmem:[%s5 + $0x38] sm:$0xff]
  %v325 = vld [vmem:[%s5 + $0x40] sm:$0xff]
  %v326 = vld [vmem:[%s5 + $0x48] sm:$0xff]
  %v327 = vld [vmem:[%s5 + $0x50] sm:$0xff]
  %v328 = vld [vmem:[%s5 + $0x58] sm:$0xff]
  %v329 = vld [vmem:[%s5 + $0x60] sm:$0xff]
  %v330 = vld [vmem:[%s5 + $0x68] sm:$0xff]
  %v331 = vld [vmem:[%s5 + $0x70] sm:$0xff]
  %v332 = vld [vmem:[%s5 + $0x78] sm:$0xff]
  %v333 = vld [vmem:[%s6] sm:$0x1]
  %v335 = vlaneseq
  %v336 = vshrl.u32 %v335, 7
  %v337 = vsub.s32 0, %v336
  %v338 = vrot.slane %v333, %v337
  %340 = vmatprep.subr.mxu0 0.0
  %341 = vmatpush1.msra.mxu0 %v332
  %342 = vmatprep.subr.mxu0 0.0
  %343 = vmatpush1.msra.mxu0 %v331
  %344 = vmatprep.subr.mxu0 0.0
  %345 = vmatpush1.msra.mxu0 %v330
  %346 = vmatprep.subr.mxu0 0.0
  %347 = vmatpush1.msra.mxu0 %v329
  %348 = vmatprep.subr.mxu0 0.0
  %349 = vmatpush1.msra.mxu0 %v328
  %350 = vmatprep.subr.mxu0 0.0
  %351 = vmatpush1.msra.mxu0 %v327
  %352 = vmatprep.subr.mxu0 0.0
  %353 = vmatpush1.msra.mxu0 %v326
  %354 = vmatprep.subr.mxu0 0.0
  %355 = vmatpush1.msra.mxu0 %v325
  %356 = vmatprep.subr.mxu0 0.0
  %357 = vmatpush1.msra.mxu0 %v324
  %358 = vmatprep.subr.mxu0 0.0
  %359 = vmatpush1.msra.mxu0 %v323
  %360 = vmatprep.subr.mxu0 0.0
  %361 = vmatpush1.msra.mxu0 %v322
  %362 = vmatprep.subr.mxu0 0.0
  %363 = vmatpush1.msra.mxu0 %v321
  %364 = vmatprep.subr.mxu0 0.0
  %365 = vmatpush1.msra.mxu0 %v320
  %366 = vmatprep.subr.mxu0 0.0
  %367 = vmatpush1.msra.mxu0 %v319
  %368 = vmatprep.subr.mxu0 0.0
  %369 = vmatpush1.msra.mxu0 %v318
  %370 = vmatprep.subr.mxu0 0.0
  %371 = vmatpush1.msra.mxu0 %v317
  %372 = vmatprep.subr.mxu0 0.0
  %373 = vmatpush2.msra.mxu0 0.0
  %374 = vmatprep.subr.mxu0 0.0
  %375 = vmatpush2.msra.mxu0 0.0
  %376 = vmatprep.subr.mxu0 0.0
  %377 = vmatpush2.msra.mxu0 0.0
  %378 = vmatprep.subr.mxu0 0.0
  %379 = vmatpush2.msra.mxu0 0.0
  %380 = vmatprep.subr.mxu0 0.0
  %381 = vmatpush2.msra.mxu0 0.0
  %382 = vmatprep.subr.mxu0 0.0
  %383 = vmatpush2.msra.mxu0 0.0
  %384 = vmatprep.subr.mxu0 0.0
  %385 = vmatpush2.msra.mxu0 0.0
  %386 = vmatprep.subr.mxu0 0.0
  %387 = vmatpush2.msra.mxu0 0.0
  %388 = vmatprep.subr.mxu0 0.0
  %389 = vmatpush2.msra.mxu0 0.0
  %390 = vmatprep.subr.mxu0 0.0
  %391 = vmatpush2.msra.mxu0 0.0
  %392 = vmatprep.subr.mxu0 0.0
  %393 = vmatpush2.msra.mxu0 0.0
  %394 = vmatprep.subr.mxu0 0.0
  %395 = vmatpush2.msra.mxu0 0.0
  %396 = vmatprep.subr.mxu0 0.0
  %397 = vmatpush2.msra.mxu0 0.0
  %398 = vmatprep.subr.mxu0 0.0
  %399 = vmatpush2.msra.mxu0 0.0
  %400 = vmatprep.subr.mxu0 0.0
  %401 = vmatpush2.msra.mxu0 0.0
  %402 = vmatprep.subr.mxu0 0.0
  %403 = vmatpush2.msra.mxu0 0.0
  %404 = vmatprep.mubr.f32.mxu0 0.0
  %405 = vmatmul.mubr.f32.gmra.mxu0 %v310
  %v406 = vpop.f32.mrf.mxu0
  %v407 = vadd.f32 %v338, %v406
  %v408 = vpop.f32.mrf.mxu0
  %409 = vmatprep.mubr.f32.mxu0 0.0
  %410 = vmatmul.mubr.f32.gmra.mxu0 %v312
  %v411 = vpop.f32.mrf.mxu0
  %v412 = vadd.f32 %v338, %v411
  %v413 = vpop.f32.mrf.mxu0
  %414 = vmatprep.mubr.f32.mxu0 0.0
  %415 = vmatmul.mubr.f32.gmra.mxu0 %v314
  %v416 = vpop.f32.mrf.mxu0
  %v417 = vadd.f32 %v338, %v416
  %v418 = vpop.f32.mrf.mxu0
  %419 = vmatprep.mubr.f32.mxu0 0.0
  %420 = vmatmul.mubr.f32.gmra.mxu0 %v316
  %v421 = vpop.f32.mrf.mxu0
  %v422 = vadd.f32 %v338, %v421
  %v423 = vpop.f32.mrf.mxu0
  %424 = vdwg.mxu0
  %v425 = vxor.u32 %v407, 2147483648
  %v426 = vxor.u32 %v412, 2147483648
  %v427 = vxor.u32 %v417, 2147483648
  %v428 = vxor.u32 %v422, 2147483648
  %v429 = vmul.f32 %v425, 1.442695
  %v430 = vpow.pop %v429
  %v431 = vmul.f32 %v426, 1.442695
  %v432 = vpow.pop %v431
  %v433 = vmul.f32 %v427, 1.442695
  %v434 = vpow.pop %v433
  %v435 = vmul.f32 %v428, 1.442695
  %v436 = vpow.pop %v435
  %v437 = vadd.f32 %v430, 1.0
  %v438 = vadd.f32 %v432, 1.0
  %v439 = vadd.f32 %v434, 1.0
  %v440 = vadd.f32 %v436, 1.0
  %v441 = vrcp.pop %v437
  %v442 = vmul.f32 1.0, %v441
  %v443 = vrcp.pop %v438
  %v444 = vmul.f32 1.0, %v443
  %v445 = vrcp.pop %v439
  %v446 = vmul.f32 1.0, %v445
  %v447 = vrcp.pop %v440
  %v448 = vmul.f32 1.0, %v447
  %v449 = vld [vmem:[%s7] sm:$0xff]
  %v450 = vld [vmem:[%s7 + $0x8] sm:$0xff]
  %v451 = vld [vmem:[%s7 + $0x10] sm:$0xff]
  %v452 = vld [vmem:[%s7 + $0x18] sm:$0xff]
  %v453 = vld [vmem:[%s7 + $0x20] sm:$0xff]
  %v454 = vld [vmem:[%s7 + $0x28] sm:$0xff]
  %v455 = vld [vmem:[%s7 + $0x30] sm:$0xff]
  %v456 = vld [vmem:[%s7 + $0x38] sm:$0xff]
  %v457 = vld [vmem:[%s7 + $0x40] sm:$0xff]
  %v458 = vld [vmem:[%s7 + $0x48] sm:$0xff]
  %v459 = vld [vmem:[%s7 + $0x50] sm:$0xff]
  %v460 = vld [vmem:[%s7 + $0x58] sm:$0xff]
  %v461 = vld [vmem:[%s7 + $0x60] sm:$0xff]
  %v462 = vld [vmem:[%s7 + $0x68] sm:$0xff]
  %v463 = vld [vmem:[%s7 + $0x70] sm:$0xff]
  %v464 = vld [vmem:[%s7 + $0x78] sm:$0xff]
  %v465 = vld [vmem:[%s7 + $0x80] sm:$0xff]
  %v466 = vld [vmem:[%s7 + $0x88] sm:$0xff]
  %v467 = vld [vmem:[%s7 + $0x90] sm:$0xff]
  %v468 = vld [vmem:[%s7 + $0x98] sm:$0xff]
  %v469 = vld [vmem:[%s7 + $0xa0] sm:$0xff]
  %v470 = vld [vmem:[%s7 + $0xa8] sm:$0xff]
  %v471 = vld [vmem:[%s7 + $0xb0] sm:$0xff]
  %v472 = vld [vmem:[%s7 + $0xb8] sm:$0xff]
  %v473 = vld [vmem:[%s7 + $0xc0] sm:$0xff]
  %v474 = vld [vmem:[%s7 + $0xc8] sm:$0xff]
  %v475 = vld [vmem:[%s7 + $0xd0] sm:$0xff]
  %v476 = vld [vmem:[%s7 + $0xd8] sm:$0xff]
  %v477 = vld [vmem:[%s7 + $0xe0] sm:$0xff]
  %v478 = vld [vmem:[%s7 + $0xe8] sm:$0xff]
  %v479 = vld [vmem:[%s7 + $0xf0] sm:$0xff]
  %v480 = vld [vmem:[%s7 + $0xf8] sm:$0xff]
  %481 = vmatprep.subr.mxu0 0.0
  %482 = vmatpush1.msra.mxu0 %v480
  %483 = vmatprep.subr.mxu0 0.0
  %484 = vmatpush1.msra.mxu0 %v479
  %485 = vmatprep.subr.mxu0 0.0
  %486 = vmatpush1.msra.mxu0 %v478
  %487 = vmatprep.subr.mxu0 0.0
  %488 = vmatpush1.msra.mxu0 %v477
  %489 = vmatprep.subr.mxu0 0.0
  %490 = vmatpush1.msra.mxu0 %v476
  %491 = vmatprep.subr.mxu0 0.0
  %492 = vmatpush1.msra.mxu0 %v475
  %493 = vmatprep.subr.mxu0 0.0
  %494 = vmatpush1.msra.mxu0 %v474
  %495 = vmatprep.subr.mxu0 0.0
  %496 = vmatpush1.msra.mxu0 %v473
  %497 = vmatprep.subr.mxu0 0.0
  %498 = vmatpush1.msra.mxu0 %v472
  %499 = vmatprep.subr.mxu0 0.0
  %500 = vmatpush1.msra.mxu0 %v471
  %501 = vmatprep.subr.mxu0 0.0
  %502 = vmatpush1.msra.mxu0 %v470
  %503 = vmatprep.subr.mxu0 0.0
  %504 = vmatpush1.msra.mxu0 %v469
  %505 = vmatprep.subr.mxu0 0.0
  %506 = vmatpush1.msra.mxu0 %v468
  %507 = vmatprep.subr.mxu0 0.0
  %508 = vmatpush1.msra.mxu0 %v467
  %509 = vmatprep.subr.mxu0 0.0
  %510 = vmatpush1.msra.mxu0 %v466
  %511 = vmatprep.subr.mxu0 0.0
  %512 = vmatpush1.msra.mxu0 %v465
  %513 = vmatprep.subr.mxu0 0.0
  %514 = vmatpush2.msra.mxu0 0.0
  %515 = vmatprep.subr.mxu0 0.0
  %516 = vmatpush2.msra.mxu0 0.0
  %517 = vmatprep.subr.mxu0 0.0
  %518 = vmatpush2.msra.mxu0 0.0
  %519 = vmatprep.subr.mxu0 0.0
  %520 = vmatpush2.msra.mxu0 0.0
  %521 = vmatprep.subr.mxu0 0.0
  %522 = vmatpush2.msra.mxu0 0.0
  %523 = vmatprep.subr.mxu0 0.0
  %524 = vmatpush2.msra.mxu0 0.0
  %525 = vmatprep.subr.mxu0 0.0
  %526 = vmatpush2.msra.mxu0 0.0
  %527 = vmatprep.subr.mxu0 0.0
  %528 = vmatpush2.msra.mxu0 0.0
  %529 = vmatprep.subr.mxu0 0.0
  %530 = vmatpush2.msra.mxu0 0.0
  %531 = vmatprep.subr.mxu0 0.0
  %532 = vmatpush2.msra.mxu0 0.0
  %533 = vmatprep.subr.mxu0 0.0
  %534 = vmatpush2.msra.mxu0 0.0
  %535 = vmatprep.subr.mxu0 0.0
  %536 = vmatpush2.msra.mxu0 0.0
  %537 = vmatprep.subr.mxu0 0.0
  %538 = vmatpush2.msra.mxu0 0.0
  %539 = vmatprep.subr.mxu0 0.0
  %540 = vmatpush2.msra.mxu0 0.0
  %541 = vmatprep.subr.mxu0 0.0
  %542 = vmatpush2.msra.mxu0 0.0
  %543 = vmatprep.subr.mxu0 0.0
  %544 = vmatpush2.msra.mxu0 0.0
  %545 = vmatprep.mubr.f32.mxu0 0.0
  %546 = vmatmul.mubr.f32.gmra.mxu0 %v444
  %v547 = vpop.f32.mrf.mxu0
  %v548 = vadd.f32 0.0, %v547
  %v549 = vpop.f32.mrf.mxu0
  %550 = vdwg.mxu0
  %551 = vmatprep.subr.mxu0 0.0
  %552 = vmatpush1.msra.mxu0 %v464
  %553 = vmatprep.subr.mxu0 0.0
  %554 = vmatpush1.msra.mxu0 %v463
  %555 = vmatprep.subr.mxu0 0.0
  %556 = vmatpush1.msra.mxu0 %v462
  %557 = vmatprep.subr.mxu0 0.0
  %558 = vmatpush1.msra.mxu0 %v461
  %559 = vmatprep.subr.mxu0 0.0
  %560 = vmatpush1.msra.mxu0 %v460
  %561 = vmatprep.subr.mxu0 0.0
  %562 = vmatpush1.msra.mxu0 %v459
  %563 = vmatprep.subr.mxu0 0.0
  %564 = vmatpush1.msra.mxu0 %v458
  %565 = vmatprep.subr.mxu0 0.0
  %566 = vmatpush1.msra.mxu0 %v457
  %567 = vmatprep.subr.mxu0 0.0
  %568 = vmatpush1.msra.mxu0 %v456
  %569 = vmatprep.subr.mxu0 0.0
  %570 = vmatpush1.msra.mxu0 %v455
  %571 = vmatprep.subr.mxu0 0.0
  %572 = vmatpush1.msra.mxu0 %v454
  %573 = vmatprep.subr.mxu0 0.0
  %574 = vmatpush1.msra.mxu0 %v453
  %575 = vmatprep.subr.mxu0 0.0
  %576 = vmatpush1.msra.mxu0 %v452
  %577 = vmatprep.subr.mxu0 0.0
  %578 = vmatpush1.msra.mxu0 %v451
  %579 = vmatprep.subr.mxu0 0.0
  %580 = vmatpush1.msra.mxu0 %v450
  %581 = vmatprep.subr.mxu0 0.0
  %582 = vmatpush1.msra.mxu0 %v449
  %583 = vmatprep.subr.mxu0 0.0
  %584 = vmatpush2.msra.mxu0 0.0
  %585 = vmatprep.subr.mxu0 0.0
  %586 = vmatpush2.msra.mxu0 0.0
  %587 = vmatprep.subr.mxu0 0.0
  %588 = vmatpush2.msra.mxu0 0.0
  %589 = vmatprep.subr.mxu0 0.0
  %590 = vmatpush2.msra.mxu0 0.0
  %591 = vmatprep.subr.mxu0 0.0
  %592 = vmatpush2.msra.mxu0 0.0
  %593 = vmatprep.subr.mxu0 0.0
  %594 = vmatpush2.msra.mxu0 0.0
  %595 = vmatprep.subr.mxu0 0.0
  %596 = vmatpush2.msra.mxu0 0.0
  %597 = vmatprep.subr.mxu0 0.0
  %598 = vmatpush2.msra.mxu0 0.0
  %599 = vmatprep.subr.mxu0 0.0
  %600 = vmatpush2.msra.mxu0 0.0
  %601 = vmatprep.subr.mxu0 0.0
  %602 = vmatpush2.msra.mxu0 0.0
  %603 = vmatprep.subr.mxu0 0.0
  %604 = vmatpush2.msra.mxu0 0.0
  %605 = vmatprep.subr.mxu0 0.0
  %606 = vmatpush2.msra.mxu0 0.0
  %607 = vmatprep.subr.mxu0 0.0
  %608 = vmatpush2.msra.mxu0 0.0
  %609 = vmatprep.subr.mxu0 0.0
  %610 = vmatpush2.msra.mxu0 0.0
  %611 = vmatprep.subr.mxu0 0.0
  %612 = vmatpush2.msra.mxu0 0.0
  %613 = vmatprep.subr.mxu0 0.0
  %614 = vmatpush2.msra.mxu0 0.0
  %615 = vmatprep.mubr.f32.mxu0 0.0
  %616 = vmatmul.mubr.f32.gmra.mxu0 %v442
  %v617 = vpop.f32.mrf.mxu0
  %v618 = vadd.f32 %v548, %v617
  %v619 = vpop.f32.mrf.mxu0
  %620 = vdwg.mxu0
  %v621 = vld [vmem:[%s7 + $0x100] sm:$0xff]
  %v622 = vld [vmem:[%s7 + $0x108] sm:$0xff]
  %v623 = vld [vmem:[%s7 + $0x110] sm:$0xff]
  %v624 = vld [vmem:[%s7 + $0x118] sm:$0xff]
  %v625 = vld [vmem:[%s7 + $0x120] sm:$0xff]
  %v626 = vld [vmem:[%s7 + $0x128] sm:$0xff]
  %v627 = vld [vmem:[%s7 + $0x130] sm:$0xff]
  %v628 = vld [vmem:[%s7 + $0x138] sm:$0xff]
  %v629 = vld [vmem:[%s7 + $0x140] sm:$0xff]
  %v630 = vld [vmem:[%s7 + $0x148] sm:$0xff]
  %v631 = vld [vmem:[%s7 + $0x150] sm:$0xff]
  %v632 = vld [vmem:[%s7 + $0x158] sm:$0xff]
  %v633 = vld [vmem:[%s7 + $0x160] sm:$0xff]
  %v634 = vld [vmem:[%s7 + $0x168] sm:$0xff]
  %v635 = vld [vmem:[%s7 + $0x170] sm:$0xff]
  %v636 = vld [vmem:[%s7 + $0x178] sm:$0xff]
  %637 = vmatprep.subr.mxu0 0.0
  %638 = vmatpush1.msra.mxu0 %v636
  %639 = vmatprep.subr.mxu0 0.0
  %640 = vmatpush1.msra.mxu0 %v635
  %641 = vmatprep.subr.mxu0 0.0
  %642 = vmatpush1.msra.mxu0 %v634
  %643 = vmatprep.subr.mxu0 0.0
  %644 = vmatpush1.msra.mxu0 %v633
  %645 = vmatprep.subr.mxu0 0.0
  %646 = vmatpush1.msra.mxu0 %v632
  %647 = vmatprep.subr.mxu0 0.0
  %648 = vmatpush1.msra.mxu0 %v631
  %649 = vmatprep.subr.mxu0 0.0
  %650 = vmatpush1.msra.mxu0 %v630
  %651 = vmatprep.subr.mxu0 0.0
  %652 = vmatpush1.msra.mxu0 %v629
  %653 = vmatprep.subr.mxu0 0.0
  %654 = vmatpush1.msra.mxu0 %v628
  %655 = vmatprep.subr.mxu0 0.0
  %656 = vmatpush1.msra.mxu0 %v627
  %657 = vmatprep.subr.mxu0 0.0
  %658 = vmatpush1.msra.mxu0 %v626
  %659 = vmatprep.subr.mxu0 0.0
  %660 = vmatpush1.msra.mxu0 %v625
  %661 = vmatprep.subr.mxu0 0.0
  %662 = vmatpush1.msra.mxu0 %v624
  %663 = vmatprep.subr.mxu0 0.0
  %664 = vmatpush1.msra.mxu0 %v623
  %665 = vmatprep.subr.mxu0 0.0
  %666 = vmatpush1.msra.mxu0 %v622
  %667 = vmatprep.subr.mxu0 0.0
  %668 = vmatpush1.msra.mxu0 %v621
  %669 = vmatprep.subr.mxu0 0.0
  %670 = vmatpush2.msra.mxu0 0.0
  %671 = vmatprep.subr.mxu0 0.0
  %672 = vmatpush2.msra.mxu0 0.0
  %673 = vmatprep.subr.mxu0 0.0
  %674 = vmatpush2.msra.mxu0 0.0
  %675 = vmatprep.subr.mxu0 0.0
  %676 = vmatpush2.msra.mxu0 0.0
  %677 = vmatprep.subr.mxu0 0.0
  %678 = vmatpush2.msra.mxu0 0.0
  %679 = vmatprep.subr.mxu0 0.0
  %680 = vmatpush2.msra.mxu0 0.0
  %681 = vmatprep.subr.mxu0 0.0
  %682 = vmatpush2.msra.mxu0 0.0
  %683 = vmatprep.subr.mxu0 0.0
  %684 = vmatpush2.msra.mxu0 0.0
  %685 = vmatprep.subr.mxu0 0.0
  %686 = vmatpush2.msra.mxu0 0.0
  %687 = vmatprep.subr.mxu0 0.0
  %688 = vmatpush2.msra.mxu0 0.0
  %689 = vmatprep.subr.mxu0 0.0
  %690 = vmatpush2.msra.mxu0 0.0
  %691 = vmatprep.subr.mxu0 0.0
  %692 = vmatpush2.msra.mxu0 0.0
  %693 = vmatprep.subr.mxu0 0.0
  %694 = vmatpush2.msra.mxu0 0.0
  %695 = vmatprep.subr.mxu0 0.0
  %696 = vmatpush2.msra.mxu0 0.0
  %697 = vmatprep.subr.mxu0 0.0
  %698 = vmatpush2.msra.mxu0 0.0
  %699 = vmatprep.subr.mxu0 0.0
  %700 = vmatpush2.msra.mxu0 0.0
  %701 = vmatprep.mubr.f32.mxu0 0.0
  %702 = vmatmul.mubr.f32.gmra.mxu0 %v446
  %v703 = vpop.f32.mrf.mxu0
  %v704 = vadd.f32 0.0, %v703
  %v705 = vpop.f32.mrf.mxu0
  %706 = vdwg.mxu0
  %v707 = vadd.f32 %v618, %v704
  %v708 = vld [vmem:[%s7 + $0x180] sm:$0xff]
  %v709 = vld [vmem:[%s7 + $0x188] sm:$0xff]
  %v710 = vld [vmem:[%s7 + $0x190] sm:$0xff]
  %v711 = vld [vmem:[%s7 + $0x198] sm:$0xff]
  %v712 = vld [vmem:[%s7 + $0x1a0] sm:$0xff]
  %v713 = vld [vmem:[%s7 + $0x1a8] sm:$0xff]
  %v714 = vld [vmem:[%s7 + $0x1b0] sm:$0xff]
  %v715 = vld [vmem:[%s7 + $0x1b8] sm:$0xff]
  %v716 = vld [vmem:[%s7 + $0x1c0] sm:$0xff]
  %v717 = vld [vmem:[%s7 + $0x1c8] sm:$0xff]
  %v718 = vld [vmem:[%s7 + $0x1d0] sm:$0xff]
  %v719 = vld [vmem:[%s7 + $0x1d8] sm:$0xff]
  %v720 = vld [vmem:[%s7 + $0x1e0] sm:$0xff]
  %v721 = vld [vmem:[%s7 + $0x1e8] sm:$0xff]
  %v722 = vld [vmem:[%s7 + $0x1f0] sm:$0xff]
  %v723 = vld [vmem:[%s7 + $0x1f8] sm:$0xff]
  %724 = vmatprep.subr.mxu0 0.0
  %725 = vmatpush1.msra.mxu0 %v723
  %726 = vmatprep.subr.mxu0 0.0
  %727 = vmatpush1.msra.mxu0 %v722
  %728 = vmatprep.subr.mxu0 0.0
  %729 = vmatpush1.msra.mxu0 %v721
  %730 = vmatprep.subr.mxu0 0.0
  %731 = vmatpush1.msra.mxu0 %v720
  %732 = vmatprep.subr.mxu0 0.0
  %733 = vmatpush1.msra.mxu0 %v719
  %734 = vmatprep.subr.mxu0 0.0
  %735 = vmatpush1.msra.mxu0 %v718
  %736 = vmatprep.subr.mxu0 0.0
  %737 = vmatpush1.msra.mxu0 %v717
  %738 = vmatprep.subr.mxu0 0.0
  %739 = vmatpush1.msra.mxu0 %v716
  %740 = vmatprep.subr.mxu0 0.0
  %741 = vmatpush1.msra.mxu0 %v715
  %742 = vmatprep.subr.mxu0 0.0
  %743 = vmatpush1.msra.mxu0 %v714
  %744 = vmatprep.subr.mxu0 0.0
  %745 = vmatpush1.msra.mxu0 %v713
  %746 = vmatprep.subr.mxu0 0.0
  %747 = vmatpush1.msra.mxu0 %v712
  %748 = vmatprep.subr.mxu0 0.0
  %749 = vmatpush1.msra.mxu0 %v711
  %750 = vmatprep.subr.mxu0 0.0
  %751 = vmatpush1.msra.mxu0 %v710
  %752 = vmatprep.subr.mxu0 0.0
  %753 = vmatpush1.msra.mxu0 %v709
  %754 = vmatprep.subr.mxu0 0.0
  %755 = vmatpush1.msra.mxu0 %v708
  %756 = vmatprep.subr.mxu0 0.0
  %757 = vmatpush2.msra.mxu0 0.0
  %758 = vmatprep.subr.mxu0 0.0
  %759 = vmatpush2.msra.mxu0 0.0
  %760 = vmatprep.subr.mxu0 0.0
  %761 = vmatpush2.msra.mxu0 0.0
  %762 = vmatprep.subr.mxu0 0.0
  %763 = vmatpush2.msra.mxu0 0.0
  %764 = vmatprep.subr.mxu0 0.0
  %765 = vmatpush2.msra.mxu0 0.0
  %766 = vmatprep.subr.mxu0 0.0
  %767 = vmatpush2.msra.mxu0 0.0
  %768 = vmatprep.subr.mxu0 0.0
  %769 = vmatpush2.msra.mxu0 0.0
  %770 = vmatprep.subr.mxu0 0.0
  %771 = vmatpush2.msra.mxu0 0.0
  %772 = vmatprep.subr.mxu0 0.0
  %773 = vmatpush2.msra.mxu0 0.0
  %774 = vmatprep.subr.mxu0 0.0
  %775 = vmatpush2.msra.mxu0 0.0
  %776 = vmatprep.subr.mxu0 0.0
  %777 = vmatpush2.msra.mxu0 0.0
  %778 = vmatprep.subr.mxu0 0.0
  %779 = vmatpush2.msra.mxu0 0.0
  %780 = vmatprep.subr.mxu0 0.0
  %781 = vmatpush2.msra.mxu0 0.0
  %782 = vmatprep.subr.mxu0 0.0
  %783 = vmatpush2.msra.mxu0 0.0
  %784 = vmatprep.subr.mxu0 0.0
  %785 = vmatpush2.msra.mxu0 0.0
  %786 = vmatprep.subr.mxu0 0.0
  %787 = vmatpush2.msra.mxu0 0.0
  %788 = vmatprep.mubr.f32.mxu0 0.0
  %789 = vmatmul.mubr.f32.gmra.mxu0 %v448
  %v790 = vpop.f32.mrf.mxu0
  %v791 = vadd.f32 0.0, %v790
  %v792 = vpop.f32.mrf.mxu0
  %793 = vdwg.mxu0
  %v794 = vadd.f32 %v707, %v791
  %v795 = vld [vmem:[%s8] sm:$0x1]
  %v797 = vlaneseq
  %v798 = vshrl.u32 %v797, 7
  %v799 = vsub.s32 0, %v798
  %v800 = vrot.slane %v795, %v799
  %v802 = vadd.f32 %v794, %v800
  %v803 = vxor.u32 %v802, 2147483648
  %v804 = vmul.f32 %v803, 1.442695
  %v805 = vpow.pop %v804
  %v806 = vadd.f32 %v805, 1.0
  %v807 = vrcp.pop %v806
  %v808 = vmul.f32 1.0, %v807
  %v809 = vld [vmem:[%s9] sm:$0xff]
  %v810 = vld [vmem:[%s9 + $0x8] sm:$0xff]
  %v811 = vld [vmem:[%s9 + $0x10] sm:$0xff]
  %v812 = vld [vmem:[%s9 + $0x18] sm:$0xff]
  %v813 = vld [vmem:[%s9 + $0x20] sm:$0xff]
  %v814 = vld [vmem:[%s9 + $0x28] sm:$0xff]
  %v815 = vld [vmem:[%s9 + $0x30] sm:$0xff]
  %v816 = vld [vmem:[%s9 + $0x38] sm:$0xff]
  %v817 = vld [vmem:[%s9 + $0x40] sm:$0xff]
  %v818 = vld [vmem:[%s9 + $0x48] sm:$0xff]
  %v819 = vld [vmem:[%s9 + $0x50] sm:$0xff]
  %v820 = vld [vmem:[%s9 + $0x58] sm:$0xff]
  %v821 = vld [vmem:[%s9 + $0x60] sm:$0xff]
  %v822 = vld [vmem:[%s9 + $0x68] sm:$0xff]
  %v823 = vld [vmem:[%s9 + $0x70] sm:$0xff]
  %v824 = vld [vmem:[%s9 + $0x78] sm:$0xff]
  %v825 = vld [vmem:[%s10] sm:$0x1]
  %v827 = vlaneseq
  %v828 = vshrl.u32 %v827, 7
  %v829 = vsub.s32 0, %v828
  %v830 = vrot.slane %v825, %v829
  %832 = vmatprep.subr.mxu0 0.0
  %833 = vmatpush1.msra.mxu0 %v824
  %834 = vmatprep.subr.mxu0 0.0
  %835 = vmatpush1.msra.mxu0 %v823
  %836 = vmatprep.subr.mxu0 0.0
  %837 = vmatpush1.msra.mxu0 %v822
  %838 = vmatprep.subr.mxu0 0.0
  %839 = vmatpush1.msra.mxu0 %v821
  %840 = vmatprep.subr.mxu0 0.0
  %841 = vmatpush1.msra.mxu0 %v820
  %842 = vmatprep.subr.mxu0 0.0
  %843 = vmatpush1.msra.mxu0 %v819
  %844 = vmatprep.subr.mxu0 0.0
  %845 = vmatpush1.msra.mxu0 %v818
  %846 = vmatprep.subr.mxu0 0.0
  %847 = vmatpush1.msra.mxu0 %v817
  %848 = vmatprep.subr.mxu0 0.0
  %849 = vmatpush1.msra.mxu0 %v816
  %850 = vmatprep.subr.mxu0 0.0
  %851 = vmatpush1.msra.mxu0 %v815
  %852 = vmatprep.subr.mxu0 0.0
  %853 = vmatpush1.msra.mxu0 %v814
  %854 = vmatprep.subr.mxu0 0.0
  %855 = vmatpush1.msra.mxu0 %v813
  %856 = vmatprep.subr.mxu0 0.0
  %857 = vmatpush1.msra.mxu0 %v812
  %858 = vmatprep.subr.mxu0 0.0
  %859 = vmatpush1.msra.mxu0 %v811
  %860 = vmatprep.subr.mxu0 0.0
  %861 = vmatpush1.msra.mxu0 %v810
  %862 = vmatprep.subr.mxu0 0.0
  %863 = vmatpush1.msra.mxu0 %v809
  %864 = vmatprep.subr.mxu0 0.0
  %865 = vmatpush2.msra.mxu0 0.0
  %866 = vmatprep.subr.mxu0 0.0
  %867 = vmatpush2.msra.mxu0 0.0
  %868 = vmatprep.subr.mxu0 0.0
  %869 = vmatpush2.msra.mxu0 0.0
  %870 = vmatprep.subr.mxu0 0.0
  %871 = vmatpush2.msra.mxu0 0.0
  %872 = vmatprep.subr.mxu0 0.0
  %873 = vmatpush2.msra.mxu0 0.0
  %874 = vmatprep.subr.mxu0 0.0
  %875 = vmatpush2.msra.mxu0 0.0
  %876 = vmatprep.subr.mxu0 0.0
  %877 = vmatpush2.msra.mxu0 0.0
  %878 = vmatprep.subr.mxu0 0.0
  %879 = vmatpush2.msra.mxu0 0.0
  %880 = vmatprep.subr.mxu0 0.0
  %881 = vmatpush2.msra.mxu0 0.0
  %882 = vmatprep.subr.mxu0 0.0
  %883 = vmatpush2.msra.mxu0 0.0
  %884 = vmatprep.subr.mxu0 0.0
  %885 = vmatpush2.msra.mxu0 0.0
  %886 = vmatprep.subr.mxu0 0.0
  %887 = vmatpush2.msra.mxu0 0.0
  %888 = vmatprep.subr.mxu0 0.0
  %889 = vmatpush2.msra.mxu0 0.0
  %890 = vmatprep.subr.mxu0 0.0
  %891 = vmatpush2.msra.mxu0 0.0
  %892 = vmatprep.subr.mxu0 0.0
  %893 = vmatpush2.msra.mxu0 0.0
  %894 = vmatprep.subr.mxu0 0.0
  %895 = vmatpush2.msra.mxu0 0.0
  %896 = vmatprep.mubr.f32.mxu0 0.0
  %897 = vmatmul.mubr.f32.gmra.mxu0 %v808
  %v898 = vpop.f32.mrf.mxu0
  %v899 = vadd.f32 %v830, %v898
  %v900 = vpop.f32.mrf.mxu0
  %901 = vdwg.mxu0
  %v902 = vxor.u32 %v899, 2147483648
  %v903 = vmul.f32 %v902, 1.442695
  %v904 = vpow.pop %v903
  %v905 = vadd.f32 %v904, 1.0
  %v906 = vrcp.pop %v905
  %v907 = vmul.f32 1.0, %v906
  %v908 = vld [vmem:[%s11] sm:$0xff]
  %v909 = vld [vmem:[%s11 + $0x8] sm:$0xff]
  %v910 = vld [vmem:[%s11 + $0x10] sm:$0xff]
  %v911 = vld [vmem:[%s11 + $0x18] sm:$0xff]
  %v912 = vld [vmem:[%s11 + $0x20] sm:$0xff]
  %v913 = vld [vmem:[%s11 + $0x28] sm:$0xff]
  %v914 = vld [vmem:[%s11 + $0x30] sm:$0xff]
  %v915 = vld [vmem:[%s11 + $0x38] sm:$0xff]
  %v916 = vld [vmem:[%s11 + $0x40] sm:$0xff]
  %v917 = vld [vmem:[%s11 + $0x48] sm:$0xff]
  %v918 = vld [vmem:[%s11 + $0x50] sm:$0xff]
  %v919 = vld [vmem:[%s11 + $0x58] sm:$0xff]
  %v920 = vld [vmem:[%s11 + $0x60] sm:$0xff]
  %v921 = vld [vmem:[%s11 + $0x68] sm:$0xff]
  %v922 = vld [vmem:[%s11 + $0x70] sm:$0xff]
  %v923 = vld [vmem:[%s11 + $0x78] sm:$0xff]
  %v924 = vld [vmem:[%s12] sm:$0x1]
  %v926 = vlaneseq
  %v927 = vshrl.u32 %v926, 7
  %v928 = vsub.s32 0, %v927
  %v929 = vrot.slane %v924, %v928
  %931 = vmatprep.subr.mxu0 0.0
  %932 = vmatpush1.msra.mxu0 %v923
  %933 = vmatprep.subr.mxu0 0.0
  %934 = vmatpush1.msra.mxu0 %v922
  %935 = vmatprep.subr.mxu0 0.0
  %936 = vmatpush1.msra.mxu0 %v921
  %937 = vmatprep.subr.mxu0 0.0
  %938 = vmatpush1.msra.mxu0 %v920
  %939 = vmatprep.subr.mxu0 0.0
  %940 = vmatpush1.msra.mxu0 %v919
  %941 = vmatprep.subr.mxu0 0.0
  %942 = vmatpush1.msra.mxu0 %v918
  %943 = vmatprep.subr.mxu0 0.0
  %944 = vmatpush1.msra.mxu0 %v917
  %945 = vmatprep.subr.mxu0 0.0
  %946 = vmatpush1.msra.mxu0 %v916
  %947 = vmatprep.subr.mxu0 0.0
  %948 = vmatpush1.msra.mxu0 %v915
  %949 = vmatprep.subr.mxu0 0.0
  %950 = vmatpush1.msra.mxu0 %v914
  %951 = vmatprep.subr.mxu0 0.0
  %952 = vmatpush1.msra.mxu0 %v913
  %953 = vmatprep.subr.mxu0 0.0
  %954 = vmatpush1.msra.mxu0 %v912
  %955 = vmatprep.subr.mxu0 0.0
  %956 = vmatpush1.msra.mxu0 %v911
  %957 = vmatprep.subr.mxu0 0.0
  %958 = vmatpush1.msra.mxu0 %v910
  %959 = vmatprep.subr.mxu0 0.0
  %960 = vmatpush1.msra.mxu0 %v909
  %961 = vmatprep.subr.mxu0 0.0
  %962 = vmatpush1.msra.mxu0 %v908
  %963 = vmatprep.subr.mxu0 0.0
  %964 = vmatpush2.msra.mxu0 0.0
  %965 = vmatprep.subr.mxu0 0.0
  %966 = vmatpush2.msra.mxu0 0.0
  %967 = vmatprep.subr.mxu0 0.0
  %968 = vmatpush2.msra.mxu0 0.0
  %969 = vmatprep.subr.mxu0 0.0
  %970 = vmatpush2.msra.mxu0 0.0
  %971 = vmatprep.subr.mxu0 0.0
  %972 = vmatpush2.msra.mxu0 0.0
  %973 = vmatprep.subr.mxu0 0.0
  %974 = vmatpush2.msra.mxu0 0.0
  %975 = vmatprep.subr.mxu0 0.0
  %976 = vmatpush2.msra.mxu0 0.0
  %977 = vmatprep.subr.mxu0 0.0
  %978 = vmatpush2.msra.mxu0 0.0
  %979 = vmatprep.subr.mxu0 0.0
  %980 = vmatpush2.msra.mxu0 0.0
  %981 = vmatprep.subr.mxu0 0.0
  %982 = vmatpush2.msra.mxu0 0.0
  %983 = vmatprep.subr.mxu0 0.0
  %984 = vmatpush2.msra.mxu0 0.0
  %985 = vmatprep.subr.mxu0 0.0
  %986 = vmatpush2.msra.mxu0 0.0
  %987 = vmatprep.subr.mxu0 0.0
  %988 = vmatpush2.msra.mxu0 0.0
  %989 = vmatprep.subr.mxu0 0.0
  %990 = vmatpush2.msra.mxu0 0.0
  %991 = vmatprep.subr.mxu0 0.0
  %992 = vmatpush2.msra.mxu0 0.0
  %993 = vmatprep.subr.mxu0 0.0
  %994 = vmatpush2.msra.mxu0 0.0
  %995 = vmatprep.mubr.f32.mxu0 0.0
  %996 = vmatmul.mubr.f32.gmra.mxu0 %v907
  %v997 = vpop.f32.mrf.mxu0
  %v998 = vadd.f32 %v929, %v997
  %v999 = vpop.f32.mrf.mxu0
  %1000 = vdwg.mxu0
  %1001 = vst [vmem:[%s13] sm:$0xff] %v998
  // Predicated region
  $region54: #{_forward_impl.1} parent=0 // pred_check
    _
  $region55: #{_forward_impl.1} parent=0 // pred_check_branch
    %1003 = sbr.rel (0) target = $region57
  $region56: #{_forward_impl.1} parent=0 // pred_region
    _
  $region57: #{_forward_impl.1} parent=0 // pred_fallthru
    _
  // Predicated region
  $region58: #{_forward_impl.1} parent=0 // pred_check
    _
  $region59: #{_forward_impl.1} parent=0 // pred_check_branch
    %1005 = sbr.rel (0) target = $region61
  $region60: #{_forward_impl.1} parent=0 // pred_region
    _
  $region61: #{_forward_impl.1} parent=0 // pred_fallthru
    _

</llo_original>
